<compile_context>
chip_gen: v7x
topology: tpu7x:2x2x1
jax: 0.10.0
libtpu: 0.0.40
codegen_flags: <defaults>
</compile_context>

<pallas_src>
import jax
import jax.numpy as jnp
from jax.experimental import pallas as pl
from jax.experimental.pallas import tpu as pltpu

INPUT_SIZE = 3
HIDDEN_SIZE = 50
HP = 128  # hidden size padded to one 128-lane tile (per gate)


def _make_gru_kernel(T, B, BP, HP):
    def gru_kernel(x_ref, wih_ref, whh_ref, bx_ref, bhn_ref, fcw_ref, fcb_ref,
                   out_ref, xp_ref):
        # Hoisted input projection for ALL time steps in one MXU matmul:
        #   (T*BP, I) @ (I, 3*HP) + combined bias  ->  (T*BP, 3*HP)
        xp_ref[...] = (
            jnp.dot(x_ref[...], wih_ref[...], preferred_element_type=jnp.float32)
            + bx_ref[...]
        )

        bhn = bhn_ref[...]                        # (1, HP), hoisted once
        h = jnp.zeros((BP, HP), jnp.float32)      # recurrent state carried in vregs

        for t in range(T):                        # tiny static T -> fully unrolled
            xg = xp_ref[t * BP:(t + 1) * BP, :]   # (BP, 3*HP) input-side gates
            # Single fused hidden-side matmul for all three gates.
            hg = jnp.dot(h, whh_ref[...], preferred_element_type=jnp.float32)
            r = jax.nn.sigmoid(xg[:, 0:HP] + hg[:, 0:HP])
            z = jax.nn.sigmoid(xg[:, HP:2 * HP] + hg[:, HP:2 * HP])
            n = jnp.tanh(xg[:, 2 * HP:3 * HP] + r * (hg[:, 2 * HP:3 * HP] + bhn))
            h = (1.0 - z) * n + z * h

        # Final Linear(H, 1) as VPU multiply + XLU lane reduce (no N=1 MXU matmul).
        y = jnp.sum(h * fcw_ref[...], axis=-1, keepdims=True) + fcb_ref[...]
        out_ref[...] = jnp.exp(y[:B, :])

    return gru_kernel


def _prepare_kernel_params(params, hp=HP):
    """PyTorch-layout GRU params -> fused / lane-padded kernel layout."""
    H = params["w_hh"].shape[-1]
    I = params["w_ih"].shape[-1]
    w_ih, w_hh = params["w_ih"], params["w_hh"]      # (3H, I), (3H, H), gates [r|z|n]
    b_ih, b_hh = params["b_ih"], params["b_hh"]      # (3H,), (3H,)

    wih = jnp.zeros((I, 3 * hp), jnp.float32)        # x-side weights, gates concat
    whh = jnp.zeros((hp, 3 * hp), jnp.float32)       # h-side weights, gates concat
    bx = jnp.zeros((1, 3 * hp), jnp.float32)         # bias added to input projection
    for g in range(3):
        wih = wih.at[:, g * hp:g * hp + H].set(w_ih[g * H:(g + 1) * H, :].T)
        whh = whh.at[:H, g * hp:g * hp + H].set(w_hh[g * H:(g + 1) * H, :].T)
        bg = b_ih[g * H:(g + 1) * H]
        if g < 2:                                    # r, z: fold b_ih + b_hh
            bg = bg + b_hh[g * H:(g + 1) * H]
        bx = bx.at[0, g * hp:g * hp + H].set(bg)
    # n-gate hidden bias stays separate (it sits inside r * (h@W_hn + b_hn)).
    bhn = jnp.zeros((1, hp), jnp.float32).at[0, :H].set(b_hh[2 * H:3 * H])
    fcw = jnp.zeros((1, hp), jnp.float32).at[0, :H].set(params["fc_w"][0])
    fcb = params["fc_b"].reshape(1, 1).astype(jnp.float32)
    return wih, whh, bx, bhn, fcw, fcb


def gru_model_forward(x, params):
    """x: (B, T, I) float32 -> (B, 1) float32, matching GRUModel.forward."""
    B, T, I = x.shape
    BP = ((B + 7) // 8) * 8                          # pad batch to sublane multiple
    x_tbi = jnp.transpose(x, (1, 0, 2)).astype(jnp.float32)       # (T, B, I)
    x_flat = jnp.pad(x_tbi, ((0, 0), (0, BP - B), (0, 0))).reshape(T * BP, I)

    wih, whh, bx, bhn, fcw, fcb = _prepare_kernel_params(params)
    vmem = pl.BlockSpec(memory_space=pltpu.MemorySpace.VMEM)
    kernel = _make_gru_kernel(T, B, BP, HP)

    return pl.pallas_call(
        kernel,
        out_shape=jax.ShapeDtypeStruct((B, 1), jnp.float32),
        in_specs=[vmem] * 7,
        out_specs=vmem,
        scratch_shapes=[pltpu.VMEM((T * BP, 3 * HP), jnp.float32)],
    )(x_flat, wih, whh, bx, bhn, fcw, fcb)


def init_params(key, input_size, hidden_size):
    """Deterministic init mimicking PyTorch's U(-1/sqrt(H), 1/sqrt(H)), PyTorch layout."""
    k = 1.0 / jnp.sqrt(jnp.float32(hidden_size))
    keys = jax.random.split(key, 6)
    u = lambda kk, shape: jax.random.uniform(kk, shape, jnp.float32, -k, k)
    return {
        "w_ih": u(keys[0], (3 * hidden_size, input_size)),   # rows: [r | z | n]
        "w_hh": u(keys[1], (3 * hidden_size, hidden_size)),
        "b_ih": u(keys[2], (3 * hidden_size,)),
        "b_hh": u(keys[3], (3 * hidden_size,)),
        "fc_w": u(keys[4], (1, hidden_size)),
        "fc_b": u(keys[5], (1,)),
    }


def reference_forward(x, params):
    """Pure-JAX reference of the same GRU recurrence (PyTorch nn.GRU semantics)."""
    H = params["w_hh"].shape[-1]
    W_ih, W_hh = params["w_ih"], params["w_hh"]
    b_ih, b_hh = params["b_ih"], params["b_hh"]

    def step(h, x_t):
        gi = x_t @ W_ih.T + b_ih
        gh = h @ W_hh.T + b_hh
        i_r, i_z, i_n = gi[:, :H], gi[:, H:2 * H], gi[:, 2 * H:]
        h_r, h_z, h_n = gh[:, :H], gh[:, H:2 * H], gh[:, 2 * H:]
        r = jax.nn.sigmoid(i_r + h_r)
        z = jax.nn.sigmoid(i_z + h_z)
        n = jnp.tanh(i_n + r * h_n)
        return (1.0 - z) * n + z * h, None

    B = x.shape[0]
    h0 = jnp.zeros((B, H), jnp.float32)
    h_T, _ = jax.lax.scan(step, h0, jnp.transpose(x, (1, 0, 2)))
    return jnp.exp(h_T @ params["fc_w"].T + params["fc_b"])


if __name__ == "__main__":
    key = jax.random.PRNGKey(0)
    pkey, xkey = jax.random.split(key)

    B, T = 4, 8
    params = init_params(pkey, INPUT_SIZE, HIDDEN_SIZE)
    x = jax.random.normal(xkey, (B, T, INPUT_SIZE), jnp.float32)

    out = jax.block_until_ready(gru_model_forward(x, params))
    ref = reference_forward(x, params)

    assert out.shape == (B, 1)
    assert jnp.allclose(out, ref, rtol=1e-4, atol=1e-4), (out, ref)

    print("KERNEL_OK")
</pallas_src>

<mosaic_0001>
module attributes {stable_mosaic.version = 11 : i64} {
  func.func @gru_kernel(%arg0: memref<64x3xf32, #tpu.memory_space<vmem>>, %arg1: memref<3x384xf32, #tpu.memory_space<vmem>>, %arg2: memref<128x384xf32, #tpu.memory_space<vmem>>, %arg3: memref<1x384xf32, #tpu.memory_space<vmem>>, %arg4: memref<1x128xf32, #tpu.memory_space<vmem>>, %arg5: memref<1x128xf32, #tpu.memory_space<vmem>>, %arg6: memref<1x1xf32, #tpu.memory_space<vmem>>, %arg7: memref<4x1xf32, #tpu.memory_space<vmem>>, %arg8: memref<64x384xf32, #tpu.memory_space<vmem>>) attributes {dimension_semantics = [], scalar_prefetch = 0 : i64, scratch_operands = 1 : i64, tpu.core_type = #tpu.core_type<tc>} {
    %c0 = arith.constant 0 : index
    %c0_0 = arith.constant 0 : index
    %0 = vector.load %arg0[%c0, %c0_0] : memref<64x3xf32, #tpu.memory_space<vmem>>, vector<64x3xf32>
    %c0_1 = arith.constant 0 : index
    %c0_2 = arith.constant 0 : index
    %1 = vector.load %arg1[%c0_1, %c0_2] : memref<3x384xf32, #tpu.memory_space<vmem>>, vector<3x384xf32>
    %cst = arith.constant dense<0.000000e+00> : vector<64x384xf32>
    %2 = tpu.matmul %0, %1, %cst {dimension_numbers = #tpu.dot_dimension_numbers<[1], [0], [0], [1], [0, 0, 1, 1], [], []>} : vector<64x3xf32>, vector<3x384xf32>, vector<64x384xf32> -> vector<64x384xf32>
    %c0_3 = arith.constant 0 : index
    %c0_4 = arith.constant 0 : index
    %3 = vector.load %arg3[%c0_3, %c0_4] : memref<1x384xf32, #tpu.memory_space<vmem>>, vector<1x384xf32>
    %4 = vector.broadcast %3 : vector<1x384xf32> to vector<64x384xf32>
    %5 = arith.addf %2, %4 : vector<64x384xf32>
    %c0_5 = arith.constant 0 : index
    %c0_6 = arith.constant 0 : index
    %6 = vector.load %arg8[%c0_5, %c0_6] : memref<64x384xf32, #tpu.memory_space<vmem>>, vector<64x384xf32>
    tpu.vector_store %arg8[%c0_5, %c0_6], %5 {strides = array<i32>} : memref<64x384xf32, #tpu.memory_space<vmem>>, vector<64x384xf32>,
    %c0_7 = arith.constant 0 : index
    %c0_8 = arith.constant 0 : index
    %7 = vector.load %arg4[%c0_7, %c0_8] : memref<1x128xf32, #tpu.memory_space<vmem>>, vector<1x128xf32>
    %cst_9 = arith.constant 0.000000e+00 : f32
    %8 = vector.broadcast %cst_9 : f32 to vector<8x128xf32>
    %c0_10 = arith.constant 0 : index
    %c0_11 = arith.constant 0 : index
    %9 = vector.load %arg8[%c0_10, %c0_11] : memref<64x384xf32, #tpu.memory_space<vmem>>, vector<8x384xf32>
    %c0_12 = arith.constant 0 : index
    %c0_13 = arith.constant 0 : index
    %10 = vector.load %arg2[%c0_12, %c0_13] : memref<128x384xf32, #tpu.memory_space<vmem>>, vector<128x384xf32>
    %cst_14 = arith.constant dense<0.000000e+00> : vector<8x384xf32>
    %11 = tpu.matmul %8, %10, %cst_14 {dimension_numbers = #tpu.dot_dimension_numbers<[1], [0], [0], [1], [0, 0, 1, 1], [], []>} : vector<8x128xf32>, vector<128x384xf32>, vector<8x384xf32> -> vector<8x384xf32>
    %12 = vector.extract_strided_slice %9 {offsets = [0, 0], sizes = [8, 128], strides = [1, 1]} : vector<8x384xf32> to vector<8x128xf32>
    %13 = vector.extract_strided_slice %11 {offsets = [0, 0], sizes = [8, 128], strides = [1, 1]} : vector<8x384xf32> to vector<8x128xf32>
    %14 = arith.addf %12, %13 : vector<8x128xf32>
    %15 = arith.negf %14 : vector<8x128xf32>
    %16 = math.exp %15 : vector<8x128xf32>
    %cst_15 = arith.constant 1.000000e+00 : f32
    %17 = vector.broadcast %cst_15 : f32 to vector<8x128xf32>
    %18 = arith.addf %17, %16 : vector<8x128xf32>
    %19 = arith.divf %17, %18 : vector<8x128xf32>
    %20 = vector.extract_strided_slice %9 {offsets = [0, 128], sizes = [8, 128], strides = [1, 1]} : vector<8x384xf32> to vector<8x128xf32>
    %21 = vector.extract_strided_slice %11 {offsets = [0, 128], sizes = [8, 128], strides = [1, 1]} : vector<8x384xf32> to vector<8x128xf32>
    %22 = arith.addf %20, %21 : vector<8x128xf32>
    %23 = arith.negf %22 : vector<8x128xf32>
    %24 = math.exp %23 : vector<8x128xf32>
    %cst_16 = arith.constant 1.000000e+00 : f32
    %25 = vector.broadcast %cst_16 : f32 to vector<8x128xf32>
    %26 = arith.addf %25, %24 : vector<8x128xf32>
    %27 = arith.divf %25, %26 : vector<8x128xf32>
    %28 = vector.extract_strided_slice %9 {offsets = [0, 256], sizes = [8, 128], strides = [1, 1]} : vector<8x384xf32> to vector<8x128xf32>
    %29 = vector.extract_strided_slice %11 {offsets = [0, 256], sizes = [8, 128], strides = [1, 1]} : vector<8x384xf32> to vector<8x128xf32>
    %30 = vector.broadcast %7 : vector<1x128xf32> to vector<8x128xf32>
    %31 = arith.addf %29, %30 : vector<8x128xf32>
    %32 = arith.mulf %19, %31 : vector<8x128xf32>
    %33 = arith.addf %28, %32 : vector<8x128xf32>
    %34 = math.tanh %33 : vector<8x128xf32>
    %cst_17 = arith.constant 1.000000e+00 : f32
    %35 = vector.broadcast %cst_17 : f32 to vector<8x128xf32>
    %36 = arith.subf %35, %27 : vector<8x128xf32>
    %37 = arith.mulf %36, %34 : vector<8x128xf32>
    %38 = arith.mulf %27, %8 : vector<8x128xf32>
    %39 = arith.addf %37, %38 : vector<8x128xf32>
    %c8 = arith.constant 8 : index
    %c0_18 = arith.constant 0 : index
    %40 = vector.load %arg8[%c8, %c0_18] : memref<64x384xf32, #tpu.memory_space<vmem>>, vector<8x384xf32>
    %c0_19 = arith.constant 0 : index
    %c0_20 = arith.constant 0 : index
    %41 = vector.load %arg2[%c0_19, %c0_20] : memref<128x384xf32, #tpu.memory_space<vmem>>, vector<128x384xf32>
    %cst_21 = arith.constant dense<0.000000e+00> : vector<8x384xf32>
    %42 = tpu.matmul %39, %41, %cst_21 {dimension_numbers = #tpu.dot_dimension_numbers<[1], [0], [0], [1], [0, 0, 1, 1], [], []>} : vector<8x128xf32>, vector<128x384xf32>, vector<8x384xf32> -> vector<8x384xf32>
    %43 = vector.extract_strided_slice %40 {offsets = [0, 0], sizes = [8, 128], strides = [1, 1]} : vector<8x384xf32> to vector<8x128xf32>
    %44 = vector.extract_strided_slice %42 {offsets = [0, 0], sizes = [8, 128], strides = [1, 1]} : vector<8x384xf32> to vector<8x128xf32>
    %45 = arith.addf %43, %44 : vector<8x128xf32>
    %46 = arith.negf %45 : vector<8x128xf32>
    %47 = math.exp %46 : vector<8x128xf32>
    %cst_22 = arith.constant 1.000000e+00 : f32
    %48 = vector.broadcast %cst_22 : f32 to vector<8x128xf32>
    %49 = arith.addf %48, %47 : vector<8x128xf32>
    %50 = arith.divf %48, %49 : vector<8x128xf32>
    %51 = vector.extract_strided_slice %40 {offsets = [0, 128], sizes = [8, 128], strides = [1, 1]} : vector<8x384xf32> to vector<8x128xf32>
    %52 = vector.extract_strided_slice %42 {offsets = [0, 128], sizes = [8, 128], strides = [1, 1]} : vector<8x384xf32> to vector<8x128xf32>
    %53 = arith.addf %51, %52 : vector<8x128xf32>
    %54 = arith.negf %53 : vector<8x128xf32>
    %55 = math.exp %54 : vector<8x128xf32>
    %cst_23 = arith.constant 1.000000e+00 : f32
    %56 = vector.broadcast %cst_23 : f32 to vector<8x128xf32>
    %57 = arith.addf %56, %55 : vector<8x128xf32>
    %58 = arith.divf %56, %57 : vector<8x128xf32>
    %59 = vector.extract_strided_slice %40 {offsets = [0, 256], sizes = [8, 128], strides = [1, 1]} : vector<8x384xf32> to vector<8x128xf32>
    %60 = vector.extract_strided_slice %42 {offsets = [0, 256], sizes = [8, 128], strides = [1, 1]} : vector<8x384xf32> to vector<8x128xf32>
    %61 = vector.broadcast %7 : vector<1x128xf32> to vector<8x128xf32>
    %62 = arith.addf %60, %61 : vector<8x128xf32>
    %63 = arith.mulf %50, %62 : vector<8x128xf32>
    %64 = arith.addf %59, %63 : vector<8x128xf32>
    %65 = math.tanh %64 : vector<8x128xf32>
    %cst_24 = arith.constant 1.000000e+00 : f32
    %66 = vector.broadcast %cst_24 : f32 to vector<8x128xf32>
    %67 = arith.subf %66, %58 : vector<8x128xf32>
    %68 = arith.mulf %67, %65 : vector<8x128xf32>
    %69 = arith.mulf %58, %39 : vector<8x128xf32>
    %70 = arith.addf %68, %69 : vector<8x128xf32>
    %c16 = arith.constant 16 : index
    %c0_25 = arith.constant 0 : index
    %71 = vector.load %arg8[%c16, %c0_25] : memref<64x384xf32, #tpu.memory_space<vmem>>, vector<8x384xf32>
    %c0_26 = arith.constant 0 : index
    %c0_27 = arith.constant 0 : index
    %72 = vector.load %arg2[%c0_26, %c0_27] : memref<128x384xf32, #tpu.memory_space<vmem>>, vector<128x384xf32>
    %cst_28 = arith.constant dense<0.000000e+00> : vector<8x384xf32>
    %73 = tpu.matmul %70, %72, %cst_28 {dimension_numbers = #tpu.dot_dimension_numbers<[1], [0], [0], [1], [0, 0, 1, 1], [], []>} : vector<8x128xf32>, vector<128x384xf32>, vector<8x384xf32> -> vector<8x384xf32>
    %74 = vector.extract_strided_slice %71 {offsets = [0, 0], sizes = [8, 128], strides = [1, 1]} : vector<8x384xf32> to vector<8x128xf32>
    %75 = vector.extract_strided_slice %73 {offsets = [0, 0], sizes = [8, 128], strides = [1, 1]} : vector<8x384xf32> to vector<8x128xf32>
    %76 = arith.addf %74, %75 : vector<8x128xf32>
    %77 = arith.negf %76 : vector<8x128xf32>
    %78 = math.exp %77 : vector<8x128xf32>
    %cst_29 = arith.constant 1.000000e+00 : f32
    %79 = vector.broadcast %cst_29 : f32 to vector<8x128xf32>
    %80 = arith.addf %79, %78 : vector<8x128xf32>
    %81 = arith.divf %79, %80 : vector<8x128xf32>
    %82 = vector.extract_strided_slice %71 {offsets = [0, 128], sizes = [8, 128], strides = [1, 1]} : vector<8x384xf32> to vector<8x128xf32>
    %83 = vector.extract_strided_slice %73 {offsets = [0, 128], sizes = [8, 128], strides = [1, 1]} : vector<8x384xf32> to vector<8x128xf32>
    %84 = arith.addf %82, %83 : vector<8x128xf32>
    %85 = arith.negf %84 : vector<8x128xf32>
    %86 = math.exp %85 : vector<8x128xf32>
    %cst_30 = arith.constant 1.000000e+00 : f32
    %87 = vector.broadcast %cst_30 : f32 to vector<8x128xf32>
    %88 = arith.addf %87, %86 : vector<8x128xf32>
    %89 = arith.divf %87, %88 : vector<8x128xf32>
    %90 = vector.extract_strided_slice %71 {offsets = [0, 256], sizes = [8, 128], strides = [1, 1]} : vector<8x384xf32> to vector<8x128xf32>
    %91 = vector.extract_strided_slice %73 {offsets = [0, 256], sizes = [8, 128], strides = [1, 1]} : vector<8x384xf32> to vector<8x128xf32>
    %92 = vector.broadcast %7 : vector<1x128xf32> to vector<8x128xf32>
    %93 = arith.addf %91, %92 : vector<8x128xf32>
    %94 = arith.mulf %81, %93 : vector<8x128xf32>
    %95 = arith.addf %90, %94 : vector<8x128xf32>
    %96 = math.tanh %95 : vector<8x128xf32>
    %cst_31 = arith.constant 1.000000e+00 : f32
    %97 = vector.broadcast %cst_31 : f32 to vector<8x128xf32>
    %98 = arith.subf %97, %89 : vector<8x128xf32>
    %99 = arith.mulf %98, %96 : vector<8x128xf32>
    %100 = arith.mulf %89, %70 : vector<8x128xf32>
    %101 = arith.addf %99, %100 : vector<8x128xf32>
    %c24 = arith.constant 24 : index
    %c0_32 = arith.constant 0 : index
    %102 = vector.load %arg8[%c24, %c0_32] : memref<64x384xf32, #tpu.memory_space<vmem>>, vector<8x384xf32>
    %c0_33 = arith.constant 0 : index
    %c0_34 = arith.constant 0 : index
    %103 = vector.load %arg2[%c0_33, %c0_34] : memref<128x384xf32, #tpu.memory_space<vmem>>, vector<128x384xf32>
    %cst_35 = arith.constant dense<0.000000e+00> : vector<8x384xf32>
    %104 = tpu.matmul %101, %103, %cst_35 {dimension_numbers = #tpu.dot_dimension_numbers<[1], [0], [0], [1], [0, 0, 1, 1], [], []>} : vector<8x128xf32>, vector<128x384xf32>, vector<8x384xf32> -> vector<8x384xf32>
    %105 = vector.extract_strided_slice %102 {offsets = [0, 0], sizes = [8, 128], strides = [1, 1]} : vector<8x384xf32> to vector<8x128xf32>
    %106 = vector.extract_strided_slice %104 {offsets = [0, 0], sizes = [8, 128], strides = [1, 1]} : vector<8x384xf32> to vector<8x128xf32>
    %107 = arith.addf %105, %106 : vector<8x128xf32>
    %108 = arith.negf %107 : vector<8x128xf32>
    %109 = math.exp %108 : vector<8x128xf32>
    %cst_36 = arith.constant 1.000000e+00 : f32
    %110 = vector.broadcast %cst_36 : f32 to vector<8x128xf32>
    %111 = arith.addf %110, %109 : vector<8x128xf32>
    %112 = arith.divf %110, %111 : vector<8x128xf32>
    %113 = vector.extract_strided_slice %102 {offsets = [0, 128], sizes = [8, 128], strides = [1, 1]} : vector<8x384xf32> to vector<8x128xf32>
    %114 = vector.extract_strided_slice %104 {offsets = [0, 128], sizes = [8, 128], strides = [1, 1]} : vector<8x384xf32> to vector<8x128xf32>
    %115 = arith.addf %113, %114 : vector<8x128xf32>
    %116 = arith.negf %115 : vector<8x128xf32>
    %117 = math.exp %116 : vector<8x128xf32>
    %cst_37 = arith.constant 1.000000e+00 : f32
    %118 = vector.broadcast %cst_37 : f32 to vector<8x128xf32>
    %119 = arith.addf %118, %117 : vector<8x128xf32>
    %120 = arith.divf %118, %119 : vector<8x128xf32>
    %121 = vector.extract_strided_slice %102 {offsets = [0, 256], sizes = [8, 128], strides = [1, 1]} : vector<8x384xf32> to vector<8x128xf32>
    %122 = vector.extract_strided_slice %104 {offsets = [0, 256], sizes = [8, 128], strides = [1, 1]} : vector<8x384xf32> to vector<8x128xf32>
    %123 = vector.broadcast %7 : vector<1x128xf32> to vector<8x128xf32>
    %124 = arith.addf %122, %123 : vector<8x128xf32>
    %125 = arith.mulf %112, %124 : vector<8x128xf32>
    %126 = arith.addf %121, %125 : vector<8x128xf32>
    %127 = math.tanh %126 : vector<8x128xf32>
    %cst_38 = arith.constant 1.000000e+00 : f32
    %128 = vector.broadcast %cst_38 : f32 to vector<8x128xf32>
    %129 = arith.subf %128, %120 : vector<8x128xf32>
    %130 = arith.mulf %129, %127 : vector<8x128xf32>
    %131 = arith.mulf %120, %101 : vector<8x128xf32>
    %132 = arith.addf %130, %131 : vector<8x128xf32>
    %c32 = arith.constant 32 : index
    %c0_39 = arith.constant 0 : index
    %133 = vector.load %arg8[%c32, %c0_39] : memref<64x384xf32, #tpu.memory_space<vmem>>, vector<8x384xf32>
    %c0_40 = arith.constant 0 : index
    %c0_41 = arith.constant 0 : index
    %134 = vector.load %arg2[%c0_40, %c0_41] : memref<128x384xf32, #tpu.memory_space<vmem>>, vector<128x384xf32>
    %cst_42 = arith.constant dense<0.000000e+00> : vector<8x384xf32>
    %135 = tpu.matmul %132, %134, %cst_42 {dimension_numbers = #tpu.dot_dimension_numbers<[1], [0], [0], [1], [0, 0, 1, 1], [], []>} : vector<8x128xf32>, vector<128x384xf32>, vector<8x384xf32> -> vector<8x384xf32>
    %136 = vector.extract_strided_slice %133 {offsets = [0, 0], sizes = [8, 128], strides = [1, 1]} : vector<8x384xf32> to vector<8x128xf32>
    %137 = vector.extract_strided_slice %135 {offsets = [0, 0], sizes = [8, 128], strides = [1, 1]} : vector<8x384xf32> to vector<8x128xf32>
    %138 = arith.addf %136, %137 : vector<8x128xf32>
    %139 = arith.negf %138 : vector<8x128xf32>
    %140 = math.exp %139 : vector<8x128xf32>
    %cst_43 = arith.constant 1.000000e+00 : f32
    %141 = vector.broadcast %cst_43 : f32 to vector<8x128xf32>
    %142 = arith.addf %141, %140 : vector<8x128xf32>
    %143 = arith.divf %141, %142 : vector<8x128xf32>
    %144 = vector.extract_strided_slice %133 {offsets = [0, 128], sizes = [8, 128], strides = [1, 1]} : vector<8x384xf32> to vector<8x128xf32>
    %145 = vector.extract_strided_slice %135 {offsets = [0, 128], sizes = [8, 128], strides = [1, 1]} : vector<8x384xf32> to vector<8x128xf32>
    %146 = arith.addf %144, %145 : vector<8x128xf32>
    %147 = arith.negf %146 : vector<8x128xf32>
    %148 = math.exp %147 : vector<8x128xf32>
    %cst_44 = arith.constant 1.000000e+00 : f32
    %149 = vector.broadcast %cst_44 : f32 to vector<8x128xf32>
    %150 = arith.addf %149, %148 : vector<8x128xf32>
    %151 = arith.divf %149, %150 : vector<8x128xf32>
    %152 = vector.extract_strided_slice %133 {offsets = [0, 256], sizes = [8, 128], strides = [1, 1]} : vector<8x384xf32> to vector<8x128xf32>
    %153 = vector.extract_strided_slice %135 {offsets = [0, 256], sizes = [8, 128], strides = [1, 1]} : vector<8x384xf32> to vector<8x128xf32>
    %154 = vector.broadcast %7 : vector<1x128xf32> to vector<8x128xf32>
    %155 = arith.addf %153, %154 : vector<8x128xf32>
    %156 = arith.mulf %143, %155 : vector<8x128xf32>
    %157 = arith.addf %152, %156 : vector<8x128xf32>
    %158 = math.tanh %157 : vector<8x128xf32>
    %cst_45 = arith.constant 1.000000e+00 : f32
    %159 = vector.broadcast %cst_45 : f32 to vector<8x128xf32>
    %160 = arith.subf %159, %151 : vector<8x128xf32>
    %161 = arith.mulf %160, %158 : vector<8x128xf32>
    %162 = arith.mulf %151, %132 : vector<8x128xf32>
    %163 = arith.addf %161, %162 : vector<8x128xf32>
    %c40 = arith.constant 40 : index
    %c0_46 = arith.constant 0 : index
    %164 = vector.load %arg8[%c40, %c0_46] : memref<64x384xf32, #tpu.memory_space<vmem>>, vector<8x384xf32>
    %c0_47 = arith.constant 0 : index
    %c0_48 = arith.constant 0 : index
    %165 = vector.load %arg2[%c0_47, %c0_48] : memref<128x384xf32, #tpu.memory_space<vmem>>, vector<128x384xf32>
    %cst_49 = arith.constant dense<0.000000e+00> : vector<8x384xf32>
    %166 = tpu.matmul %163, %165, %cst_49 {dimension_numbers = #tpu.dot_dimension_numbers<[1], [0], [0], [1], [0, 0, 1, 1], [], []>} : vector<8x128xf32>, vector<128x384xf32>, vector<8x384xf32> -> vector<8x384xf32>
    %167 = vector.extract_strided_slice %164 {offsets = [0, 0], sizes = [8, 128], strides = [1, 1]} : vector<8x384xf32> to vector<8x128xf32>
    %168 = vector.extract_strided_slice %166 {offsets = [0, 0], sizes = [8, 128], strides = [1, 1]} : vector<8x384xf32> to vector<8x128xf32>
    %169 = arith.addf %167, %168 : vector<8x128xf32>
    %170 = arith.negf %169 : vector<8x128xf32>
    %171 = math.exp %170 : vector<8x128xf32>
    %cst_50 = arith.constant 1.000000e+00 : f32
    %172 = vector.broadcast %cst_50 : f32 to vector<8x128xf32>
    %173 = arith.addf %172, %171 : vector<8x128xf32>
    %174 = arith.divf %172, %173 : vector<8x128xf32>
    %175 = vector.extract_strided_slice %164 {offsets = [0, 128], sizes = [8, 128], strides = [1, 1]} : vector<8x384xf32> to vector<8x128xf32>
    %176 = vector.extract_strided_slice %166 {offsets = [0, 128], sizes = [8, 128], strides = [1, 1]} : vector<8x384xf32> to vector<8x128xf32>
    %177 = arith.addf %175, %176 : vector<8x128xf32>
    %178 = arith.negf %177 : vector<8x128xf32>
    %179 = math.exp %178 : vector<8x128xf32>
    %cst_51 = arith.constant 1.000000e+00 : f32
    %180 = vector.broadcast %cst_51 : f32 to vector<8x128xf32>
    %181 = arith.addf %180, %179 : vector<8x128xf32>
    %182 = arith.divf %180, %181 : vector<8x128xf32>
    %183 = vector.extract_strided_slice %164 {offsets = [0, 256], sizes = [8, 128], strides = [1, 1]} : vector<8x384xf32> to vector<8x128xf32>
    %184 = vector.extract_strided_slice %166 {offsets = [0, 256], sizes = [8, 128], strides = [1, 1]} : vector<8x384xf32> to vector<8x128xf32>
    %185 = vector.broadcast %7 : vector<1x128xf32> to vector<8x128xf32>
    %186 = arith.addf %184, %185 : vector<8x128xf32>
    %187 = arith.mulf %174, %186 : vector<8x128xf32>
    %188 = arith.addf %183, %187 : vector<8x128xf32>
    %189 = math.tanh %188 : vector<8x128xf32>
    %cst_52 = arith.constant 1.000000e+00 : f32
    %190 = vector.broadcast %cst_52 : f32 to vector<8x128xf32>
    %191 = arith.subf %190, %182 : vector<8x128xf32>
    %192 = arith.mulf %191, %189 : vector<8x128xf32>
    %193 = arith.mulf %182, %163 : vector<8x128xf32>
    %194 = arith.addf %192, %193 : vector<8x128xf32>
    %c48 = arith.constant 48 : index
    %c0_53 = arith.constant 0 : index
    %195 = vector.load %arg8[%c48, %c0_53] : memref<64x384xf32, #tpu.memory_space<vmem>>, vector<8x384xf32>
    %c0_54 = arith.constant 0 : index
    %c0_55 = arith.constant 0 : index
    %196 = vector.load %arg2[%c0_54, %c0_55] : memref<128x384xf32, #tpu.memory_space<vmem>>, vector<128x384xf32>
    %cst_56 = arith.constant dense<0.000000e+00> : vector<8x384xf32>
    %197 = tpu.matmul %194, %196, %cst_56 {dimension_numbers = #tpu.dot_dimension_numbers<[1], [0], [0], [1], [0, 0, 1, 1], [], []>} : vector<8x128xf32>, vector<128x384xf32>, vector<8x384xf32> -> vector<8x384xf32>
    %198 = vector.extract_strided_slice %195 {offsets = [0, 0], sizes = [8, 128], strides = [1, 1]} : vector<8x384xf32> to vector<8x128xf32>
    %199 = vector.extract_strided_slice %197 {offsets = [0, 0], sizes = [8, 128], strides = [1, 1]} : vector<8x384xf32> to vector<8x128xf32>
    %200 = arith.addf %198, %199 : vector<8x128xf32>
    %201 = arith.negf %200 : vector<8x128xf32>
    %202 = math.exp %201 : vector<8x128xf32>
    %cst_57 = arith.constant 1.000000e+00 : f32
    %203 = vector.broadcast %cst_57 : f32 to vector<8x128xf32>
    %204 = arith.addf %203, %202 : vector<8x128xf32>
    %205 = arith.divf %203, %204 : vector<8x128xf32>
    %206 = vector.extract_strided_slice %195 {offsets = [0, 128], sizes = [8, 128], strides = [1, 1]} : vector<8x384xf32> to vector<8x128xf32>
    %207 = vector.extract_strided_slice %197 {offsets = [0, 128], sizes = [8, 128], strides = [1, 1]} : vector<8x384xf32> to vector<8x128xf32>
    %208 = arith.addf %206, %207 : vector<8x128xf32>
    %209 = arith.negf %208 : vector<8x128xf32>
    %210 = math.exp %209 : vector<8x128xf32>
    %cst_58 = arith.constant 1.000000e+00 : f32
    %211 = vector.broadcast %cst_58 : f32 to vector<8x128xf32>
    %212 = arith.addf %211, %210 : vector<8x128xf32>
    %213 = arith.divf %211, %212 : vector<8x128xf32>
    %214 = vector.extract_strided_slice %195 {offsets = [0, 256], sizes = [8, 128], strides = [1, 1]} : vector<8x384xf32> to vector<8x128xf32>
    %215 = vector.extract_strided_slice %197 {offsets = [0, 256], sizes = [8, 128], strides = [1, 1]} : vector<8x384xf32> to vector<8x128xf32>
    %216 = vector.broadcast %7 : vector<1x128xf32> to vector<8x128xf32>
    %217 = arith.addf %215, %216 : vector<8x128xf32>
    %218 = arith.mulf %205, %217 : vector<8x128xf32>
    %219 = arith.addf %214, %218 : vector<8x128xf32>
    %220 = math.tanh %219 : vector<8x128xf32>
    %cst_59 = arith.constant 1.000000e+00 : f32
    %221 = vector.broadcast %cst_59 : f32 to vector<8x128xf32>
    %222 = arith.subf %221, %213 : vector<8x128xf32>
    %223 = arith.mulf %222, %220 : vector<8x128xf32>
    %224 = arith.mulf %213, %194 : vector<8x128xf32>
    %225 = arith.addf %223, %224 : vector<8x128xf32>
    %c56 = arith.constant 56 : index
    %c0_60 = arith.constant 0 : index
    %226 = vector.load %arg8[%c56, %c0_60] : memref<64x384xf32, #tpu.memory_space<vmem>>, vector<8x384xf32>
    %c0_61 = arith.constant 0 : index
    %c0_62 = arith.constant 0 : index
    %227 = vector.load %arg2[%c0_61, %c0_62] : memref<128x384xf32, #tpu.memory_space<vmem>>, vector<128x384xf32>
    %cst_63 = arith.constant dense<0.000000e+00> : vector<8x384xf32>
    %228 = tpu.matmul %225, %227, %cst_63 {dimension_numbers = #tpu.dot_dimension_numbers<[1], [0], [0], [1], [0, 0, 1, 1], [], []>} : vector<8x128xf32>, vector<128x384xf32>, vector<8x384xf32> -> vector<8x384xf32>
    %229 = vector.extract_strided_slice %226 {offsets = [0, 0], sizes = [8, 128], strides = [1, 1]} : vector<8x384xf32> to vector<8x128xf32>
    %230 = vector.extract_strided_slice %228 {offsets = [0, 0], sizes = [8, 128], strides = [1, 1]} : vector<8x384xf32> to vector<8x128xf32>
    %231 = arith.addf %229, %230 : vector<8x128xf32>
    %232 = arith.negf %231 : vector<8x128xf32>
    %233 = math.exp %232 : vector<8x128xf32>
    %cst_64 = arith.constant 1.000000e+00 : f32
    %234 = vector.broadcast %cst_64 : f32 to vector<8x128xf32>
    %235 = arith.addf %234, %233 : vector<8x128xf32>
    %236 = arith.divf %234, %235 : vector<8x128xf32>
    %237 = vector.extract_strided_slice %226 {offsets = [0, 128], sizes = [8, 128], strides = [1, 1]} : vector<8x384xf32> to vector<8x128xf32>
    %238 = vector.extract_strided_slice %228 {offsets = [0, 128], sizes = [8, 128], strides = [1, 1]} : vector<8x384xf32> to vector<8x128xf32>
    %239 = arith.addf %237, %238 : vector<8x128xf32>
    %240 = arith.negf %239 : vector<8x128xf32>
    %241 = math.exp %240 : vector<8x128xf32>
    %cst_65 = arith.constant 1.000000e+00 : f32
    %242 = vector.broadcast %cst_65 : f32 to vector<8x128xf32>
    %243 = arith.addf %242, %241 : vector<8x128xf32>
    %244 = arith.divf %242, %243 : vector<8x128xf32>
    %245 = vector.extract_strided_slice %226 {offsets = [0, 256], sizes = [8, 128], strides = [1, 1]} : vector<8x384xf32> to vector<8x128xf32>
    %246 = vector.extract_strided_slice %228 {offsets = [0, 256], sizes = [8, 128], strides = [1, 1]} : vector<8x384xf32> to vector<8x128xf32>
    %247 = vector.broadcast %7 : vector<1x128xf32> to vector<8x128xf32>
    %248 = arith.addf %246, %247 : vector<8x128xf32>
    %249 = arith.mulf %236, %248 : vector<8x128xf32>
    %250 = arith.addf %245, %249 : vector<8x128xf32>
    %251 = math.tanh %250 : vector<8x128xf32>
    %cst_66 = arith.constant 1.000000e+00 : f32
    %252 = vector.broadcast %cst_66 : f32 to vector<8x128xf32>
    %253 = arith.subf %252, %244 : vector<8x128xf32>
    %254 = arith.mulf %253, %251 : vector<8x128xf32>
    %255 = arith.mulf %244, %225 : vector<8x128xf32>
    %256 = arith.addf %254, %255 : vector<8x128xf32>
    %c0_67 = arith.constant 0 : index
    %c0_68 = arith.constant 0 : index
    %257 = vector.load %arg5[%c0_67, %c0_68] : memref<1x128xf32, #tpu.memory_space<vmem>>, vector<1x128xf32>
    %258 = vector.broadcast %257 : vector<1x128xf32> to vector<8x128xf32>
    %259 = arith.mulf %256, %258 : vector<8x128xf32>
    %cst_69 = arith.constant dense<0.000000e+00> : vector<8xf32>
    %260 = vector.multi_reduction <add>, %259, %cst_69 [1] : vector<8x128xf32> to vector<8xf32>
    %261 = vector.shape_cast %260 : vector<8xf32> to vector<8x1xf32>
    %c0_70 = arith.constant 0 : index
    %c0_71 = arith.constant 0 : index
    %262 = vector.load %arg6[%c0_70, %c0_71] : memref<1x1xf32, #tpu.memory_space<vmem>>, vector<1x1xf32>
    %263 = vector.broadcast %262 : vector<1x1xf32> to vector<8x1xf32>
    %264 = arith.addf %261, %263 : vector<8x1xf32>
    %265 = vector.extract_strided_slice %264 {offsets = [0, 0], sizes = [4, 1], strides = [1, 1]} : vector<8x1xf32> to vector<4x1xf32>
    %266 = math.exp %265 : vector<4x1xf32>
    %c0_72 = arith.constant 0 : index
    %c0_73 = arith.constant 0 : index
    %267 = vector.load %arg7[%c0_72, %c0_73] : memref<4x1xf32, #tpu.memory_space<vmem>>, vector<4x1xf32>
    tpu.vector_store %arg7[%c0_72, %c0_73], %266 {strides = array<i32>} : memref<4x1xf32, #tpu.memory_space<vmem>>, vector<4x1xf32>,
    return
  }
}

</mosaic_0001>

<llo_original>
// kernel: tpu_custom_call.1
$region0: #{tpu_custom_call.1}
  #allocation0 [shape = 'u32[]', space=smem, size = 0x4, offset = 0x4, fixed_abs, tag = 'smem constant byte address 0x4 - core index']
  #allocation1 [shape = 'u32[144,128]{1,0:T(1,128)}', space=vmem, size = 0x12000, scoped, tag = 'internal scratch']
  #allocation2 [shape = 'f32[64,384]{1,0:T(8,128)}', space=vmem, size = 0x18000, scoped, tag = 'scratch operand']
  #allocation3 [shape = 'f32[1,1]{1,0:T(1,128)S(1)}', space=vmem, size = 0x200, scoped, tag = 'scoped memory for tpu_custom_call.1']
  %s0 = inlined_call_operand.vmem [shape: f32[64,3], index: 0, kind: input, shape index: {}]
  %s1 = inlined_call_operand.vmem [shape: f32[3,384], index: 1, kind: input, shape index: {}]
  %s2 = inlined_call_operand.hbm [shape: f32[128,384], index: 2, kind: input, shape index: {}]
  %s3 = inlined_call_operand.vmem [shape: f32[1,384], index: 3, kind: input, shape index: {}]
  %s4 = inlined_call_operand.vmem [shape: f32[1,128], index: 4, kind: input, shape index: {}]
  %s5 = inlined_call_operand.vmem [shape: f32[1,128], index: 5, kind: input, shape index: {}]
  %s6 = inlined_call_operand.<no memory space> [shape: f32[1,1], index: 6, kind: input, shape index: {}]
  %s7 = inlined_call_operand.vmem [shape: f32[4,1], index: 7, kind: output, shape index: {}]
  %s8 = sld [smem:[#allocation0]]
  $region42: #{tpu_custom_call.1} parent=0
    _
  %s10 = ssub.s32 1, %s8
  %s11 = scalar_select 0, %s10, %s8
  %v12 = vstv %s6
  %13 = vst [vmem:[#allocation3] sm:$0x1] %v12
  $region1: #{tpu_custom_call.1} parent=0
    #allocation4 [shape = 'u8[196608]{0}', space=vmem, size = 0x30000, scoped, tag = 'input window, operand 2, single buffered']
    #allocation5 [shape = 's32[1]{0}', space=sflag, size = 0x4, scoped, tag = 'scoped memory for tpu_custom_call.1']
    %14 = vsyncpa [#allocation5], 0
    // Predicated region
    $region2: #{tpu_custom_call.1} parent=1 // pred_check
      _
    $region3: #{tpu_custom_call.1} parent=1 // pred_check_branch
      %16 = sbr.rel (0) target = $region5
    $region4: #{tpu_custom_call.1} parent=1 // pred_region
      _
    $region5: #{tpu_custom_call.1} parent=1 // pred_fallthru
      _
    // Predicated region
    $region6: #{tpu_custom_call.1} parent=1 // pred_check
      _
    $region7: #{tpu_custom_call.1} parent=1 // pred_check_branch
      %18 = sbr.rel (0) target = $region9
    $region8: #{tpu_custom_call.1} parent=1 // pred_region
      _
    $region9: #{tpu_custom_call.1} parent=1 // pred_fallthru
      _
    // Predicated region
    $region10: #{tpu_custom_call.1} parent=1 // pred_check
      _
    $region11: #{tpu_custom_call.1} parent=1 // pred_check_branch
      %20 = sbr.rel (0) target = $region13
    $region12: #{tpu_custom_call.1} parent=1 // pred_region
      %s22 = ssub.s32 6144, 6144
      %23 = vsyncadd [#allocation5], %s22
      %s24 = sshll.u32 [#allocation4], 4
      %s25 = int_to_ptr.vmem [resolvable:$true] %s24
      %30 = dma.hbm_to_vmem [thread:$0]  %s2, 6144, %s25, [#allocation5], 384, 384, 24
    $region13: #{tpu_custom_call.1} parent=1 // pred_fallthru
      _
    // Predicated region
    $region14: #{tpu_custom_call.1} parent=1 // pred_check
      _
    $region15: #{tpu_custom_call.1} parent=1 // pred_check_branch
      %32 = sbr.rel (0) target = $region17
    $region16: #{tpu_custom_call.1} parent=1 // pred_region
      _
    $region17: #{tpu_custom_call.1} parent=1 // pred_fallthru
      _
    // Predicated region
    $region18: #{tpu_custom_call.1} parent=1 // pred_check
      _
    $region19: #{tpu_custom_call.1} parent=1 // pred_check_branch
      %34 = sbr.rel (0) target = $region21
    $region20: #{tpu_custom_call.1} parent=1 // pred_region
      _
    $region21: #{tpu_custom_call.1} parent=1 // pred_fallthru
      _
    // Predicated region
    $region22: #{tpu_custom_call.1} parent=1 // pred_check
      _
    $region23: #{tpu_custom_call.1} parent=1 // pred_check_branch
      %36 = sbr.rel (0) target = $region25
    $region24: #{tpu_custom_call.1} parent=1 // pred_region
      _
    $region25: #{tpu_custom_call.1} parent=1 // pred_fallthru
      _
    // Predicated region
    $region26: #{tpu_custom_call.1} parent=1 // pred_check
      _
    $region27: #{tpu_custom_call.1} parent=1 // pred_check_branch
      %38 = sbr.rel (0) target = $region29
    $region28: #{tpu_custom_call.1} parent=1 // pred_region
      _
    $region29: #{tpu_custom_call.1} parent=1 // pred_fallthru
      _
    // Predicated region
    $region30: #{tpu_custom_call.1} parent=1 // pred_check
      _
    $region31: #{tpu_custom_call.1} parent=1 // pred_check_branch
      %40 = sbr.rel (0) target = $region33
    $region32: #{tpu_custom_call.1} parent=1 // pred_region
      %41 = dma.done [#allocation5], 6144
    $region33: #{tpu_custom_call.1} parent=1 // pred_fallthru
      _
    %v42 = vld [vmem:[%s0] sm:$0xff]
    %v43 = vld [vmem:[%s0 + $0x8] sm:$0xff]
    %v44 = vld [vmem:[%s0 + $0x10] sm:$0xff]
    %v45 = vld [vmem:[%s0 + $0x18] sm:$0xff]
    %v46 = vld [vmem:[%s0 + $0x20] sm:$0xff]
    %v47 = vld [vmem:[%s0 + $0x28] sm:$0xff]
    %v48 = vld [vmem:[%s0 + $0x30] sm:$0xff]
    %v49 = vld [vmem:[%s0 + $0x38] sm:$0xff]
    %v50 = vld [vmem:[%s1] sm:$0x77]
    %v51 = vld [vmem:[%s1 + $0x8] sm:$0x7]
    %v52 = vld [vmem:[%s3] sm:$0x7]
    %v54 = vlaneseq
    %v55 = vshrl.u32 %v54, 7
    %v56 = vsub.s32 0, %v55
    %v57 = vrot.slane %v52, %v56
    %v58 = vlaneseq
    %v59 = vshrl.u32 %v58, 7
    %v60 = vsub.s32 1, %v59
    %v61 = vrot.slane %v52, %v60
    %v62 = vlaneseq
    %v63 = vshrl.u32 %v62, 7
    %v64 = vsub.s32 2, %v63
    %v65 = vrot.slane %v52, %v64
    %v71 = vcombine.high %v50, %v50
    %vm72 = vcmask 23552
    %v74 = vsel %vm72, %v42, 0
    %v77 = vsel %vm72, %v43, 0
    %v80 = vsel %vm72, %v44, 0
    %v83 = vsel %vm72, %v45, 0
    %v86 = vsel %vm72, %v46, 0
    %v89 = vsel %vm72, %v47, 0
    %v92 = vsel %vm72, %v48, 0
    %v95 = vsel %vm72, %v49, 0
    %vm97 = vcmask 1042432
    %v98 = vsel %vm97, %v50, 0
    %v100 = vsel %vm97, %v71, 0
    %v102 = vsel %vm97, %v51, 0
    %104 = vmatprep.subr.mxu0 %v100
    %105 = vmatpush1.msra.mxu0 %v98
    %106 = vmatprep.subr.mxu0 0.0
    %107 = vmatpush1.msra.mxu0 0.0
    %108 = vmatprep.subr.mxu0 0.0
    %109 = vmatpush1.msra.mxu0 0.0
    %110 = vmatprep.subr.mxu0 0.0
    %111 = vmatpush1.msra.mxu0 0.0
    %112 = vmatprep.subr.mxu0 0.0
    %113 = vmatpush1.msra.mxu0 0.0
    %114 = vmatprep.subr.mxu0 0.0
    %115 = vmatpush1.msra.mxu0 0.0
    %116 = vmatprep.subr.mxu0 0.0
    %117 = vmatpush1.msra.mxu0 0.0
    %118 = vmatprep.subr.mxu0 0.0
    %119 = vmatpush1.msra.mxu0 0.0
    %120 = vmatprep.subr.mxu0 0.0
    %121 = vmatpush1.msra.mxu0 0.0
    %122 = vmatprep.subr.mxu0 0.0
    %123 = vmatpush1.msra.mxu0 0.0
    %124 = vmatprep.subr.mxu0 0.0
    %125 = vmatpush1.msra.mxu0 0.0
    %126 = vmatprep.subr.mxu0 0.0
    %127 = vmatpush1.msra.mxu0 0.0
    %128 = vmatprep.subr.mxu0 0.0
    %129 = vmatpush1.msra.mxu0 0.0
    %130 = vmatprep.subr.mxu0 0.0
    %131 = vmatpush1.msra.mxu0 0.0
    %132 = vmatprep.subr.mxu0 0.0
    %133 = vmatpush1.msra.mxu0 0.0
    %134 = vmatprep.subr.mxu0 0.0
    %135 = vmatpush1.msra.mxu0 0.0
    %136 = vmatprep.subr.mxu0 0.0
    %137 = vmatpush1.msra.mxu0 0.0
    %138 = vmatprep.subr.mxu0 0.0
    %139 = vmatpush1.msra.mxu0 0.0
    %140 = vmatprep.subr.mxu0 0.0
    %141 = vmatpush1.msra.mxu0 0.0
    %142 = vmatprep.subr.mxu0 0.0
    %143 = vmatpush1.msra.mxu0 0.0
    %144 = vmatprep.subr.mxu0 0.0
    %145 = vmatpush1.msra.mxu0 0.0
    %146 = vmatprep.subr.mxu0 0.0
    %147 = vmatpush1.msra.mxu0 0.0
    %148 = vmatprep.subr.mxu0 0.0
    %149 = vmatpush1.msra.mxu0 0.0
    %150 = vmatprep.subr.mxu0 0.0
    %151 = vmatpush1.msra.mxu0 0.0
    %152 = vmatprep.subr.mxu0 0.0
    %153 = vmatpush1.msra.mxu0 0.0
    %154 = vmatprep.subr.mxu0 0.0
    %155 = vmatpush1.msra.mxu0 0.0
    %156 = vmatprep.subr.mxu0 0.0
    %157 = vmatpush1.msra.mxu0 0.0
    %158 = vmatprep.subr.mxu0 0.0
    %159 = vmatpush1.msra.mxu0 0.0
    %160 = vmatprep.subr.mxu0 0.0
    %161 = vmatpush1.msra.mxu0 0.0
    %162 = vmatprep.subr.mxu0 0.0
    %163 = vmatpush1.msra.mxu0 0.0
    %164 = vmatprep.subr.mxu0 0.0
    %165 = vmatpush1.msra.mxu0 0.0
    %166 = vmatprep.subr.mxu0 0.0
    %167 = vmatpush1.msra.mxu0 0.0
    %168 = vmatprep.mubr.f32.mxu0 0.0
    %169 = vmatmul.mubr.f32.gmra.mrb[0].mxu0 %v74
    %v170 = vpop.f32.mrb[0].mxu0
    %v171 = vadd.f32 %v57, %v170
    %v172 = vpop.f32.mrb[0].mxu0
    %v173 = vadd.f32 %v61, %v172
    %174 = vmatprep.mubr.f32.mxu0 0.0
    %175 = vmatmul.mubr.f32.gmra.mrb[0].mxu0 %v77
    %v176 = vpop.f32.mrb[0].mxu0
    %v177 = vadd.f32 %v57, %v176
    %v178 = vpop.f32.mrb[0].mxu0
    %v179 = vadd.f32 %v61, %v178
    %180 = vmatprep.mubr.f32.mxu0 0.0
    %181 = vmatmul.mubr.f32.gmra.mrb[0].mxu0 %v80
    %v182 = vpop.f32.mrb[0].mxu0
    %v183 = vadd.f32 %v57, %v182
    %v184 = vpop.f32.mrb[0].mxu0
    %v185 = vadd.f32 %v61, %v184
    %186 = vmatprep.mubr.f32.mxu0 0.0
    %187 = vmatmul.mubr.f32.gmra.mrb[0].mxu0 %v83
    %v188 = vpop.f32.mrb[0].mxu0
    %v189 = vadd.f32 %v57, %v188
    %v190 = vpop.f32.mrb[0].mxu0
    %v191 = vadd.f32 %v61, %v190
    %192 = vmatprep.mubr.f32.mxu0 0.0
    %193 = vmatmul.mubr.f32.gmra.mrb[0].mxu0 %v86
    %v194 = vpop.f32.mrb[0].mxu0
    %v195 = vadd.f32 %v57, %v194
    %v196 = vpop.f32.mrb[0].mxu0
    %v197 = vadd.f32 %v61, %v196
    %198 = vmatprep.mubr.f32.mxu0 0.0
    %199 = vmatmul.mubr.f32.gmra.mrb[0].mxu0 %v89
    %v200 = vpop.f32.mrb[0].mxu0
    %v201 = vadd.f32 %v57, %v200
    %v202 = vpop.f32.mrb[0].mxu0
    %v203 = vadd.f32 %v61, %v202
    %204 = vmatprep.mubr.f32.mxu0 0.0
    %205 = vmatmul.mubr.f32.gmra.mrb[0].mxu0 %v92
    %v206 = vpop.f32.mrb[0].mxu0
    %v207 = vadd.f32 %v57, %v206
    %v208 = vpop.f32.mrb[0].mxu0
    %v209 = vadd.f32 %v61, %v208
    %210 = vmatprep.mubr.f32.mxu0 0.0
    %211 = vmatmul.mubr.f32.gmra.mrb[0].mxu0 %v95
    %v212 = vpop.f32.mrb[0].mxu0
    %v213 = vadd.f32 %v57, %v212
    %v214 = vpop.f32.mrb[0].mxu0
    %v215 = vadd.f32 %v61, %v214
    %216 = vdwg.mxu0
    %217 = vmatprep.subr.mxu0 0.0
    %218 = vmatpush1.msra.mxu0 %v102
    %219 = vmatprep.subr.mxu0 0.0
    %220 = vmatpush1.msra.mxu0 0.0
    %221 = vmatprep.subr.mxu0 0.0
    %222 = vmatpush1.msra.mxu0 0.0
    %223 = vmatprep.subr.mxu0 0.0
    %224 = vmatpush1.msra.mxu0 0.0
    %225 = vmatprep.subr.mxu0 0.0
    %226 = vmatpush1.msra.mxu0 0.0
    %227 = vmatprep.subr.mxu0 0.0
    %228 = vmatpush1.msra.mxu0 0.0
    %229 = vmatprep.subr.mxu0 0.0
    %230 = vmatpush1.msra.mxu0 0.0
    %231 = vmatprep.subr.mxu0 0.0
    %232 = vmatpush1.msra.mxu0 0.0
    %233 = vmatprep.subr.mxu0 0.0
    %234 = vmatpush1.msra.mxu0 0.0
    %235 = vmatprep.subr.mxu0 0.0
    %236 = vmatpush1.msra.mxu0 0.0
    %237 = vmatprep.subr.mxu0 0.0
    %238 = vmatpush1.msra.mxu0 0.0
    %239 = vmatprep.subr.mxu0 0.0
    %240 = vmatpush1.msra.mxu0 0.0
    %241 = vmatprep.subr.mxu0 0.0
    %242 = vmatpush1.msra.mxu0 0.0
    %243 = vmatprep.subr.mxu0 0.0
    %244 = vmatpush1.msra.mxu0 0.0
    %245 = vmatprep.subr.mxu0 0.0
    %246 = vmatpush1.msra.mxu0 0.0
    %247 = vmatprep.subr.mxu0 0.0
    %248 = vmatpush1.msra.mxu0 0.0
    %249 = vmatprep.subr.mxu0 0.0
    %250 = vmatpush1.msra.mxu0 0.0
    %251 = vmatprep.subr.mxu0 0.0
    %252 = vmatpush1.msra.mxu0 0.0
    %253 = vmatprep.subr.mxu0 0.0
    %254 = vmatpush1.msra.mxu0 0.0
    %255 = vmatprep.subr.mxu0 0.0
    %256 = vmatpush1.msra.mxu0 0.0
    %257 = vmatprep.subr.mxu0 0.0
    %258 = vmatpush1.msra.mxu0 0.0
    %259 = vmatprep.subr.mxu0 0.0
    %260 = vmatpush1.msra.mxu0 0.0
    %261 = vmatprep.subr.mxu0 0.0
    %262 = vmatpush1.msra.mxu0 0.0
    %263 = vmatprep.subr.mxu0 0.0
    %264 = vmatpush1.msra.mxu0 0.0
    %265 = vmatprep.subr.mxu0 0.0
    %266 = vmatpush1.msra.mxu0 0.0
    %267 = vmatprep.subr.mxu0 0.0
    %268 = vmatpush1.msra.mxu0 0.0
    %269 = vmatprep.subr.mxu0 0.0
    %270 = vmatpush1.msra.mxu0 0.0
    %271 = vmatprep.subr.mxu0 0.0
    %272 = vmatpush1.msra.mxu0 0.0
    %273 = vmatprep.subr.mxu0 0.0
    %274 = vmatpush1.msra.mxu0 0.0
    %275 = vmatprep.subr.mxu0 0.0
    %276 = vmatpush1.msra.mxu0 0.0
    %277 = vmatprep.subr.mxu0 0.0
    %278 = vmatpush1.msra.mxu0 0.0
    %279 = vmatprep.subr.mxu0 0.0
    %280 = vmatpush1.msra.mxu0 0.0
    %281 = vmatprep.mubr.f32.mxu0 0.0
    %282 = vmatmul.mubr.f32.gmra.mrb[0].mxu0 %v74
    %v283 = vpop.f32.mrb[0].mxu0
    %v284 = vadd.f32 %v65, %v283
    %v285 = vpop.f32.mrb[0].mxu0
    %286 = vmatprep.mubr.f32.mxu0 0.0
    %287 = vmatmul.mubr.f32.gmra.mrb[0].mxu0 %v77
    %v288 = vpop.f32.mrb[0].mxu0
    %v289 = vadd.f32 %v65, %v288
    %v290 = vpop.f32.mrb[0].mxu0
    %291 = vmatprep.mubr.f32.mxu0 0.0
    %292 = vmatmul.mubr.f32.gmra.mrb[0].mxu0 %v80
    %v293 = vpop.f32.mrb[0].mxu0
    %v294 = vadd.f32 %v65, %v293
    %v295 = vpop.f32.mrb[0].mxu0
    %296 = vmatprep.mubr.f32.mxu0 0.0
    %297 = vmatmul.mubr.f32.gmra.mrb[0].mxu0 %v83
    %v298 = vpop.f32.mrb[0].mxu0
    %v299 = vadd.f32 %v65, %v298
    %v300 = vpop.f32.mrb[0].mxu0
    %301 = vmatprep.mubr.f32.mxu0 0.0
    %302 = vmatmul.mubr.f32.gmra.mrb[0].mxu0 %v86
    %v303 = vpop.f32.mrb[0].mxu0
    %v304 = vadd.f32 %v65, %v303
    %v305 = vpop.f32.mrb[0].mxu0
    %306 = vmatprep.mubr.f32.mxu0 0.0
    %307 = vmatmul.mubr.f32.gmra.mrb[0].mxu0 %v89
    %v308 = vpop.f32.mrb[0].mxu0
    %v309 = vadd.f32 %v65, %v308
    %v310 = vpop.f32.mrb[0].mxu0
    %311 = vmatprep.mubr.f32.mxu0 0.0
    %312 = vmatmul.mubr.f32.gmra.mrb[0].mxu0 %v92
    %v313 = vpop.f32.mrb[0].mxu0
    %v314 = vadd.f32 %v65, %v313
    %v315 = vpop.f32.mrb[0].mxu0
    %316 = vmatprep.mubr.f32.mxu0 0.0
    %317 = vmatmul.mubr.f32.gmra.mrb[0].mxu0 %v95
    %v318 = vpop.f32.mrb[0].mxu0
    %v319 = vadd.f32 %v65, %v318
    %v320 = vpop.f32.mrb[0].mxu0
    %321 = vdwg.mxu0
    %322 = vst [vmem:[#allocation2] sm:$0xff] %v171
    %323 = vst [vmem:[#allocation2 + $0x8] sm:$0xff] %v173
    %324 = vst [vmem:[#allocation2 + $0x10] sm:$0xff] %v284
    %325 = vst [vmem:[#allocation2 + $0x18] sm:$0xff] %v177
    %326 = vst [vmem:[#allocation2 + $0x20] sm:$0xff] %v179
    %327 = vst [vmem:[#allocation2 + $0x28] sm:$0xff] %v289
    %328 = vst [vmem:[#allocation2 + $0x30] sm:$0xff] %v183
    %329 = vst [vmem:[#allocation2 + $0x38] sm:$0xff] %v185
    %330 = vst [vmem:[#allocation2 + $0x40] sm:$0xff] %v294
    %331 = vst [vmem:[#allocation2 + $0x48] sm:$0xff] %v189
    %332 = vst [vmem:[#allocation2 + $0x50] sm:$0xff] %v191
    %333 = vst [vmem:[#allocation2 + $0x58] sm:$0xff] %v299
    %334 = vst [vmem:[#allocation2 + $0x60] sm:$0xff] %v195
    %335 = vst [vmem:[#allocation2 + $0x68] sm:$0xff] %v197
    %336 = vst [vmem:[#allocation2 + $0x70] sm:$0xff] %v304
    %337 = vst [vmem:[#allocation2 + $0x78] sm:$0xff] %v201
    %338 = vst [vmem:[#allocation2 + $0x80] sm:$0xff] %v203
    %339 = vst [vmem:[#allocation2 + $0x88] sm:$0xff] %v309
    %340 = vst [vmem:[#allocation2 + $0x90] sm:$0xff] %v207
    %341 = vst [vmem:[#allocation2 + $0x98] sm:$0xff] %v209
    %342 = vst [vmem:[#allocation2 + $0xa0] sm:$0xff] %v314
    %343 = vst [vmem:[#allocation2 + $0xa8] sm:$0xff] %v213
    %344 = vst [vmem:[#allocation2 + $0xb0] sm:$0xff] %v215
    %345 = vst [vmem:[#allocation2 + $0xb8] sm:$0xff] %v319
    %v346 = vld [vmem:[%s4] sm:$0x1]
    %v347 = vld [vmem:[#allocation2] sm:$0xff]
    %v348 = vld [vmem:[#allocation2 + $0x8] sm:$0xff]
    %v349 = vld [vmem:[#allocation2 + $0x10] sm:$0xff]
    %v350 = vld [vmem:[#allocation4] sm:$0xff]
    %v351 = vld [vmem:[#allocation4 + $0x8] sm:$0xff]
    %v352 = vld [vmem:[#allocation4 + $0x10] sm:$0xff]
    %v353 = vld [vmem:[#allocation4 + $0x18] sm:$0xff]
    %v354 = vld [vmem:[#allocation4 + $0x20] sm:$0xff]
    %v355 = vld [vmem:[#allocation4 + $0x28] sm:$0xff]
    %v356 = vld [vmem:[#allocation4 + $0x30] sm:$0xff]
    %v357 = vld [vmem:[#allocation4 + $0x38] sm:$0xff]
    %v358 = vld [vmem:[#allocation4 + $0x40] sm:$0xff]
    %v359 = vld [vmem:[#allocation4 + $0x48] sm:$0xff]
    %v360 = vld [vmem:[#allocation4 + $0x50] sm:$0xff]
    %v361 = vld [vmem:[#allocation4 + $0x58] sm:$0xff]
    %v362 = vld [vmem:[#allocation4 + $0x60] sm:$0xff]
    %v363 = vld [vmem:[#allocation4 + $0x68] sm:$0xff]
    %v364 = vld [vmem:[#allocation4 + $0x70] sm:$0xff]
    %v365 = vld [vmem:[#allocation4 + $0x78] sm:$0xff]
    %v366 = vld [vmem:[#allocation4 + $0x80] sm:$0xff]
    %v367 = vld [vmem:[#allocation4 + $0x88] sm:$0xff]
    %v368 = vld [vmem:[#allocation4 + $0x90] sm:$0xff]
    %v369 = vld [vmem:[#allocation4 + $0x98] sm:$0xff]
    %v370 = vld [vmem:[#allocation4 + $0xa0] sm:$0xff]
    %v371 = vld [vmem:[#allocation4 + $0xa8] sm:$0xff]
    %v372 = vld [vmem:[#allocation4 + $0xb0] sm:$0xff]
    %v373 = vld [vmem:[#allocation4 + $0xb8] sm:$0xff]
    %v374 = vld [vmem:[#allocation4 + $0xc0] sm:$0xff]
    %v375 = vld [vmem:[#allocation4 + $0xc8] sm:$0xff]
    %v376 = vld [vmem:[#allocation4 + $0xd0] sm:$0xff]
    %v377 = vld [vmem:[#allocation4 + $0xd8] sm:$0xff]
    %v378 = vld [vmem:[#allocation4 + $0xe0] sm:$0xff]
    %v379 = vld [vmem:[#allocation4 + $0xe8] sm:$0xff]
    %v380 = vld [vmem:[#allocation4 + $0xf0] sm:$0xff]
    %v381 = vld [vmem:[#allocation4 + $0xf8] sm:$0xff]
    %v382 = vld [vmem:[#allocation4 + $0x100] sm:$0xff]
    %v383 = vld [vmem:[#allocation4 + $0x108] sm:$0xff]
    %v384 = vld [vmem:[#allocation4 + $0x110] sm:$0xff]
    %v385 = vld [vmem:[#allocation4 + $0x118] sm:$0xff]
    %v386 = vld [vmem:[#allocation4 + $0x120] sm:$0xff]
    %v387 = vld [vmem:[#allocation4 + $0x128] sm:$0xff]
    %v388 = vld [vmem:[#allocation4 + $0x130] sm:$0xff]
    %v389 = vld [vmem:[#allocation4 + $0x138] sm:$0xff]
    %v390 = vld [vmem:[#allocation4 + $0x140] sm:$0xff]
    %v391 = vld [vmem:[#allocation4 + $0x148] sm:$0xff]
    %v392 = vld [vmem:[#allocation4 + $0x150] sm:$0xff]
    %v393 = vld [vmem:[#allocation4 + $0x158] sm:$0xff]
    %v394 = vld [vmem:[#allocation4 + $0x160] sm:$0xff]
    %v395 = vld [vmem:[#allocation4 + $0x168] sm:$0xff]
    %v396 = vld [vmem:[#allocation4 + $0x170] sm:$0xff]
    %v397 = vld [vmem:[#allocation4 + $0x178] sm:$0xff]
    %398 = vmatprep.subr.mxu0 %v351
    %399 = vmatpush1.msra.mxu0 %v350
    %400 = vmatprep.subr.mxu0 %v354
    %401 = vmatpush1.msra.mxu0 %v353
    %402 = vmatprep.subr.mxu0 %v357
    %403 = vmatpush1.msra.mxu0 %v356
    %404 = vmatprep.subr.mxu0 %v360
    %405 = vmatpush1.msra.mxu0 %v359
    %406 = vmatprep.subr.mxu0 %v363
    %407 = vmatpush1.msra.mxu0 %v362
    %408 = vmatprep.subr.mxu0 %v366
    %409 = vmatpush1.msra.mxu0 %v365
    %410 = vmatprep.subr.mxu0 %v369
    %411 = vmatpush1.msra.mxu0 %v368
    %412 = vmatprep.subr.mxu0 %v372
    %413 = vmatpush1.msra.mxu0 %v371
    %414 = vmatprep.subr.mxu0 %v375
    %415 = vmatpush1.msra.mxu0 %v374
    %416 = vmatprep.subr.mxu0 %v378
    %417 = vmatpush1.msra.mxu0 %v377
    %418 = vmatprep.subr.mxu0 %v381
    %419 = vmatpush1.msra.mxu0 %v380
    %420 = vmatprep.subr.mxu0 %v384
    %421 = vmatpush1.msra.mxu0 %v383
    %422 = vmatprep.subr.mxu0 %v387
    %423 = vmatpush1.msra.mxu0 %v386
    %424 = vmatprep.subr.mxu0 %v390
    %425 = vmatpush1.msra.mxu0 %v389
    %426 = vmatprep.subr.mxu0 %v393
    %427 = vmatpush1.msra.mxu0 %v392
    %428 = vmatprep.subr.mxu0 %v396
    %429 = vmatpush1.msra.mxu0 %v395
    %430 = vmatprep.subr.mxu0 0.0
    %431 = vmatpush1.msra.mxu0 0.0
    %432 = vmatprep.subr.mxu0 0.0
    %433 = vmatpush1.msra.mxu0 0.0
    %434 = vmatprep.subr.mxu0 0.0
    %435 = vmatpush1.msra.mxu0 0.0
    %436 = vmatprep.subr.mxu0 0.0
    %437 = vmatpush1.msra.mxu0 0.0
    %438 = vmatprep.subr.mxu0 0.0
    %439 = vmatpush1.msra.mxu0 0.0
    %440 = vmatprep.subr.mxu0 0.0
    %441 = vmatpush1.msra.mxu0 0.0
    %442 = vmatprep.subr.mxu0 0.0
    %443 = vmatpush1.msra.mxu0 0.0
    %444 = vmatprep.subr.mxu0 0.0
    %445 = vmatpush1.msra.mxu0 0.0
    %446 = vmatprep.subr.mxu0 0.0
    %447 = vmatpush1.msra.mxu0 0.0
    %448 = vmatprep.subr.mxu0 0.0
    %449 = vmatpush1.msra.mxu0 0.0
    %450 = vmatprep.subr.mxu0 0.0
    %451 = vmatpush1.msra.mxu0 0.0
    %452 = vmatprep.subr.mxu0 0.0
    %453 = vmatpush1.msra.mxu0 0.0
    %454 = vmatprep.subr.mxu0 0.0
    %455 = vmatpush1.msra.mxu0 0.0
    %456 = vmatprep.subr.mxu0 0.0
    %457 = vmatpush1.msra.mxu0 0.0
    %458 = vmatprep.subr.mxu0 0.0
    %459 = vmatpush1.msra.mxu0 0.0
    %460 = vmatprep.subr.mxu0 0.0
    %461 = vmatpush1.msra.mxu0 0.0
    %462 = vmatprep.mubr.f32.mxu0 0.0
    %463 = vmatmul.mubr.f32.gmra.mrb[0].mxu0 0.0
    %v464 = vpop.f32.mrb[0].mxu0
    %v465 = vadd.f32 0.0, %v464
    %v466 = vpop.f32.mrb[0].mxu0
    %v467 = vadd.f32 0.0, %v466
    %468 = vdwg.mxu0
    %469 = vmatprep.subr.mxu0 0.0
    %470 = vmatpush1.msra.mxu0 %v352
    %471 = vmatprep.subr.mxu0 0.0
    %472 = vmatpush1.msra.mxu0 %v355
    %473 = vmatprep.subr.mxu0 0.0
    %474 = vmatpush1.msra.mxu0 %v358
    %475 = vmatprep.subr.mxu0 0.0
    %476 = vmatpush1.msra.mxu0 %v361
    %477 = vmatprep.subr.mxu0 0.0
    %478 = vmatpush1.msra.mxu0 %v364
    %479 = vmatprep.subr.mxu0 0.0
    %480 = vmatpush1.msra.mxu0 %v367
    %481 = vmatprep.subr.mxu0 0.0
    %482 = vmatpush1.msra.mxu0 %v370
    %483 = vmatprep.subr.mxu0 0.0
    %484 = vmatpush1.msra.mxu0 %v373
    %485 = vmatprep.subr.mxu0 0.0
    %486 = vmatpush1.msra.mxu0 %v376
    %487 = vmatprep.subr.mxu0 0.0
    %488 = vmatpush1.msra.mxu0 %v379
    %489 = vmatprep.subr.mxu0 0.0
    %490 = vmatpush1.msra.mxu0 %v382
    %491 = vmatprep.subr.mxu0 0.0
    %492 = vmatpush1.msra.mxu0 %v385
    %493 = vmatprep.subr.mxu0 0.0
    %494 = vmatpush1.msra.mxu0 %v388
    %495 = vmatprep.subr.mxu0 0.0
    %496 = vmatpush1.msra.mxu0 %v391
    %497 = vmatprep.subr.mxu0 0.0
    %498 = vmatpush1.msra.mxu0 %v394
    %499 = vmatprep.subr.mxu0 0.0
    %500 = vmatpush1.msra.mxu0 %v397
    %501 = vmatprep.subr.mxu0 0.0
    %502 = vmatpush1.msra.mxu0 0.0
    %503 = vmatprep.subr.mxu0 0.0
    %504 = vmatpush1.msra.mxu0 0.0
    %505 = vmatprep.subr.mxu0 0.0
    %506 = vmatpush1.msra.mxu0 0.0
    %507 = vmatprep.subr.mxu0 0.0
    %508 = vmatpush1.msra.mxu0 0.0
    %509 = vmatprep.subr.mxu0 0.0
    %510 = vmatpush1.msra.mxu0 0.0
    %511 = vmatprep.subr.mxu0 0.0
    %512 = vmatpush1.msra.mxu0 0.0
    %513 = vmatprep.subr.mxu0 0.0
    %514 = vmatpush1.msra.mxu0 0.0
    %515 = vmatprep.subr.mxu0 0.0
    %516 = vmatpush1.msra.mxu0 0.0
    %517 = vmatprep.subr.mxu0 0.0
    %518 = vmatpush1.msra.mxu0 0.0
    %519 = vmatprep.subr.mxu0 0.0
    %520 = vmatpush1.msra.mxu0 0.0
    %521 = vmatprep.subr.mxu0 0.0
    %522 = vmatpush1.msra.mxu0 0.0
    %523 = vmatprep.subr.mxu0 0.0
    %524 = vmatpush1.msra.mxu0 0.0
    %525 = vmatprep.subr.mxu0 0.0
    %526 = vmatpush1.msra.mxu0 0.0
    %527 = vmatprep.subr.mxu0 0.0
    %528 = vmatpush1.msra.mxu0 0.0
    %529 = vmatprep.subr.mxu0 0.0
    %530 = vmatpush1.msra.mxu0 0.0
    %531 = vmatprep.subr.mxu0 0.0
    %532 = vmatpush1.msra.mxu0 0.0
    %533 = vmatprep.mubr.f32.mxu0 0.0
    %534 = vmatmul.mubr.f32.gmra.mrb[0].mxu0 0.0
    %v535 = vpop.f32.mrb[0].mxu0
    %v536 = vadd.f32 0.0, %v535
    %v537 = vpop.f32.mrb[0].mxu0
    %538 = vdwg.mxu0
    %v539 = vadd.f32 %v347, %v465
    %v540 = vxor.u32 %v539, 2147483648
    %v541 = vmul.f32 %v540, 1.442695
    %v542 = vpow.pop %v541
    %v543 = vadd.f32 %v542, 1.0
    %v544 = vrcp.pop %v543
    %v545 = vmul.f32 1.0, %v544
    %v546 = vadd.f32 %v348, %v467
    %v547 = vxor.u32 %v546, 2147483648
    %v548 = vmul.f32 %v547, 1.442695
    %v549 = vpow.pop %v548
    %v550 = vadd.f32 %v549, 1.0
    %v551 = vrcp.pop %v550
    %v552 = vmul.f32 1.0, %v551
    %v554 = vlaneseq
    %v555 = vshrl.u32 %v554, 7
    %v556 = vsub.s32 0, %v555
    %v557 = vrot.slane %v346, %v556
    %v559 = vadd.f32 %v536, %v557
    %v560 = vmul.f32 %v545, %v559
    %v561 = vadd.f32 %v349, %v560
    %v562 = vtanh.pop %v561
    %v563 = vsub.f32 1.0, %v552
    %v564 = vmul.f32 %v563, %v562
    %v565 = vmul.f32 %v552, 0.0
    %v566 = vadd.f32 %v564, %v565
    %v567 = vld [vmem:[#allocation2 + $0x18] sm:$0xff]
    %v568 = vld [vmem:[#allocation2 + $0x20] sm:$0xff]
    %v569 = vld [vmem:[#allocation2 + $0x28] sm:$0xff]
    %570 = vmatprep.subr.mxu0 %v351
    %571 = vmatpush1.msra.mxu0 %v350
    %572 = vmatprep.subr.mxu0 %v354
    %573 = vmatpush1.msra.mxu0 %v353
    %574 = vmatprep.subr.mxu0 %v357
    %575 = vmatpush1.msra.mxu0 %v356
    %576 = vmatprep.subr.mxu0 %v360
    %577 = vmatpush1.msra.mxu0 %v359
    %578 = vmatprep.subr.mxu0 %v363
    %579 = vmatpush1.msra.mxu0 %v362
    %580 = vmatprep.subr.mxu0 %v366
    %581 = vmatpush1.msra.mxu0 %v365
    %582 = vmatprep.subr.mxu0 %v369
    %583 = vmatpush1.msra.mxu0 %v368
    %584 = vmatprep.subr.mxu0 %v372
    %585 = vmatpush1.msra.mxu0 %v371
    %586 = vmatprep.subr.mxu0 %v375
    %587 = vmatpush1.msra.mxu0 %v374
    %588 = vmatprep.subr.mxu0 %v378
    %589 = vmatpush1.msra.mxu0 %v377
    %590 = vmatprep.subr.mxu0 %v381
    %591 = vmatpush1.msra.mxu0 %v380
    %592 = vmatprep.subr.mxu0 %v384
    %593 = vmatpush1.msra.mxu0 %v383
    %594 = vmatprep.subr.mxu0 %v387
    %595 = vmatpush1.msra.mxu0 %v386
    %596 = vmatprep.subr.mxu0 %v390
    %597 = vmatpush1.msra.mxu0 %v389
    %598 = vmatprep.subr.mxu0 %v393
    %599 = vmatpush1.msra.mxu0 %v392
    %600 = vmatprep.subr.mxu0 %v396
    %601 = vmatpush1.msra.mxu0 %v395
    %602 = vmatprep.subr.mxu0 0.0
    %603 = vmatpush1.msra.mxu0 0.0
    %604 = vmatprep.subr.mxu0 0.0
    %605 = vmatpush1.msra.mxu0 0.0
    %606 = vmatprep.subr.mxu0 0.0
    %607 = vmatpush1.msra.mxu0 0.0
    %608 = vmatprep.subr.mxu0 0.0
    %609 = vmatpush1.msra.mxu0 0.0
    %610 = vmatprep.subr.mxu0 0.0
    %611 = vmatpush1.msra.mxu0 0.0
    %612 = vmatprep.subr.mxu0 0.0
    %613 = vmatpush1.msra.mxu0 0.0
    %614 = vmatprep.subr.mxu0 0.0
    %615 = vmatpush1.msra.mxu0 0.0
    %616 = vmatprep.subr.mxu0 0.0
    %617 = vmatpush1.msra.mxu0 0.0
    %618 = vmatprep.subr.mxu0 0.0
    %619 = vmatpush1.msra.mxu0 0.0
    %620 = vmatprep.subr.mxu0 0.0
    %621 = vmatpush1.msra.mxu0 0.0
    %622 = vmatprep.subr.mxu0 0.0
    %623 = vmatpush1.msra.mxu0 0.0
    %624 = vmatprep.subr.mxu0 0.0
    %625 = vmatpush1.msra.mxu0 0.0
    %626 = vmatprep.subr.mxu0 0.0
    %627 = vmatpush1.msra.mxu0 0.0
    %628 = vmatprep.subr.mxu0 0.0
    %629 = vmatpush1.msra.mxu0 0.0
    %630 = vmatprep.subr.mxu0 0.0
    %631 = vmatpush1.msra.mxu0 0.0
    %632 = vmatprep.subr.mxu0 0.0
    %633 = vmatpush1.msra.mxu0 0.0
    %634 = vmatprep.mubr.f32.mxu0 0.0
    %635 = vmatmul.mubr.f32.gmra.mrb[0].mxu0 %v566
    %v636 = vpop.f32.mrb[0].mxu0
    %v637 = vadd.f32 0.0, %v636
    %v638 = vpop.f32.mrb[0].mxu0
    %v639 = vadd.f32 0.0, %v638
    %640 = vdwg.mxu0
    %641 = vmatprep.subr.mxu0 0.0
    %642 = vmatpush1.msra.mxu0 %v352
    %643 = vmatprep.subr.mxu0 0.0
    %644 = vmatpush1.msra.mxu0 %v355
    %645 = vmatprep.subr.mxu0 0.0
    %646 = vmatpush1.msra.mxu0 %v358
    %647 = vmatprep.subr.mxu0 0.0
    %648 = vmatpush1.msra.mxu0 %v361
    %649 = vmatprep.subr.mxu0 0.0
    %650 = vmatpush1.msra.mxu0 %v364
    %651 = vmatprep.subr.mxu0 0.0
    %652 = vmatpush1.msra.mxu0 %v367
    %653 = vmatprep.subr.mxu0 0.0
    %654 = vmatpush1.msra.mxu0 %v370
    %655 = vmatprep.subr.mxu0 0.0
    %656 = vmatpush1.msra.mxu0 %v373
    %657 = vmatprep.subr.mxu0 0.0
    %658 = vmatpush1.msra.mxu0 %v376
    %659 = vmatprep.subr.mxu0 0.0
    %660 = vmatpush1.msra.mxu0 %v379
    %661 = vmatprep.subr.mxu0 0.0
    %662 = vmatpush1.msra.mxu0 %v382
    %663 = vmatprep.subr.mxu0 0.0
    %664 = vmatpush1.msra.mxu0 %v385
    %665 = vmatprep.subr.mxu0 0.0
    %666 = vmatpush1.msra.mxu0 %v388
    %667 = vmatprep.subr.mxu0 0.0
    %668 = vmatpush1.msra.mxu0 %v391
    %669 = vmatprep.subr.mxu0 0.0
    %670 = vmatpush1.msra.mxu0 %v394
    %671 = vmatprep.subr.mxu0 0.0
    %672 = vmatpush1.msra.mxu0 %v397
    %673 = vmatprep.subr.mxu0 0.0
    %674 = vmatpush1.msra.mxu0 0.0
    %675 = vmatprep.subr.mxu0 0.0
    %676 = vmatpush1.msra.mxu0 0.0
    %677 = vmatprep.subr.mxu0 0.0
    %678 = vmatpush1.msra.mxu0 0.0
    %679 = vmatprep.subr.mxu0 0.0
    %680 = vmatpush1.msra.mxu0 0.0
    %681 = vmatprep.subr.mxu0 0.0
    %682 = vmatpush1.msra.mxu0 0.0
    %683 = vmatprep.subr.mxu0 0.0
    %684 = vmatpush1.msra.mxu0 0.0
    %685 = vmatprep.subr.mxu0 0.0
    %686 = vmatpush1.msra.mxu0 0.0
    %687 = vmatprep.subr.mxu0 0.0
    %688 = vmatpush1.msra.mxu0 0.0
    %689 = vmatprep.subr.mxu0 0.0
    %690 = vmatpush1.msra.mxu0 0.0
    %691 = vmatprep.subr.mxu0 0.0
    %692 = vmatpush1.msra.mxu0 0.0
    %693 = vmatprep.subr.mxu0 0.0
    %694 = vmatpush1.msra.mxu0 0.0
    %695 = vmatprep.subr.mxu0 0.0
    %696 = vmatpush1.msra.mxu0 0.0
    %697 = vmatprep.subr.mxu0 0.0
    %698 = vmatpush1.msra.mxu0 0.0
    %699 = vmatprep.subr.mxu0 0.0
    %700 = vmatpush1.msra.mxu0 0.0
    %701 = vmatprep.subr.mxu0 0.0
    %702 = vmatpush1.msra.mxu0 0.0
    %703 = vmatprep.subr.mxu0 0.0
    %704 = vmatpush1.msra.mxu0 0.0
    %705 = vmatprep.mubr.f32.mxu0 0.0
    %706 = vmatmul.mubr.f32.gmra.mrb[0].mxu0 %v566
    %v707 = vpop.f32.mrb[0].mxu0
    %v708 = vadd.f32 0.0, %v707
    %v709 = vpop.f32.mrb[0].mxu0
    %710 = vdwg.mxu0
    %v711 = vadd.f32 %v567, %v637
    %v712 = vxor.u32 %v711, 2147483648
    %v713 = vmul.f32 %v712, 1.442695
    %v714 = vpow.pop %v713
    %v715 = vadd.f32 %v714, 1.0
    %v716 = vrcp.pop %v715
    %v717 = vmul.f32 1.0, %v716
    %v718 = vadd.f32 %v568, %v639
    %v719 = vxor.u32 %v718, 2147483648
    %v720 = vmul.f32 %v719, 1.442695
    %v721 = vpow.pop %v720
    %v722 = vadd.f32 %v721, 1.0
    %v723 = vrcp.pop %v722
    %v724 = vmul.f32 1.0, %v723
    %v725 = vadd.f32 %v708, %v557
    %v726 = vmul.f32 %v717, %v725
    %v727 = vadd.f32 %v569, %v726
    %v728 = vtanh.pop %v727
    %v729 = vsub.f32 1.0, %v724
    %v730 = vmul.f32 %v729, %v728
    %v731 = vmul.f32 %v724, %v566
    %v732 = vadd.f32 %v730, %v731
    %v733 = vld [vmem:[#allocation2 + $0x30] sm:$0xff]
    %v734 = vld [vmem:[#allocation2 + $0x38] sm:$0xff]
    %v735 = vld [vmem:[#allocation2 + $0x40] sm:$0xff]
    %736 = vmatprep.subr.mxu0 %v351
    %737 = vmatpush1.msra.mxu0 %v350
    %738 = vmatprep.subr.mxu0 %v354
    %739 = vmatpush1.msra.mxu0 %v353
    %740 = vmatprep.subr.mxu0 %v357
    %741 = vmatpush1.msra.mxu0 %v356
    %742 = vmatprep.subr.mxu0 %v360
    %743 = vmatpush1.msra.mxu0 %v359
    %744 = vmatprep.subr.mxu0 %v363
    %745 = vmatpush1.msra.mxu0 %v362
    %746 = vmatprep.subr.mxu0 %v366
    %747 = vmatpush1.msra.mxu0 %v365
    %748 = vmatprep.subr.mxu0 %v369
    %749 = vmatpush1.msra.mxu0 %v368
    %750 = vmatprep.subr.mxu0 %v372
    %751 = vmatpush1.msra.mxu0 %v371
    %752 = vmatprep.subr.mxu0 %v375
    %753 = vmatpush1.msra.mxu0 %v374
    %754 = vmatprep.subr.mxu0 %v378
    %755 = vmatpush1.msra.mxu0 %v377
    %756 = vmatprep.subr.mxu0 %v381
    %757 = vmatpush1.msra.mxu0 %v380
    %758 = vmatprep.subr.mxu0 %v384
    %759 = vmatpush1.msra.mxu0 %v383
    %760 = vmatprep.subr.mxu0 %v387
    %761 = vmatpush1.msra.mxu0 %v386
    %762 = vmatprep.subr.mxu0 %v390
    %763 = vmatpush1.msra.mxu0 %v389
    %764 = vmatprep.subr.mxu0 %v393
    %765 = vmatpush1.msra.mxu0 %v392
    %766 = vmatprep.subr.mxu0 %v396
    %767 = vmatpush1.msra.mxu0 %v395
    %768 = vmatprep.subr.mxu0 0.0
    %769 = vmatpush1.msra.mxu0 0.0
    %770 = vmatprep.subr.mxu0 0.0
    %771 = vmatpush1.msra.mxu0 0.0
    %772 = vmatprep.subr.mxu0 0.0
    %773 = vmatpush1.msra.mxu0 0.0
    %774 = vmatprep.subr.mxu0 0.0
    %775 = vmatpush1.msra.mxu0 0.0
    %776 = vmatprep.subr.mxu0 0.0
    %777 = vmatpush1.msra.mxu0 0.0
    %778 = vmatprep.subr.mxu0 0.0
    %779 = vmatpush1.msra.mxu0 0.0
    %780 = vmatprep.subr.mxu0 0.0
    %781 = vmatpush1.msra.mxu0 0.0
    %782 = vmatprep.subr.mxu0 0.0
    %783 = vmatpush1.msra.mxu0 0.0
    %784 = vmatprep.subr.mxu0 0.0
    %785 = vmatpush1.msra.mxu0 0.0
    %786 = vmatprep.subr.mxu0 0.0
    %787 = vmatpush1.msra.mxu0 0.0
    %788 = vmatprep.subr.mxu0 0.0
    %789 = vmatpush1.msra.mxu0 0.0
    %790 = vmatprep.subr.mxu0 0.0
    %791 = vmatpush1.msra.mxu0 0.0
    %792 = vmatprep.subr.mxu0 0.0
    %793 = vmatpush1.msra.mxu0 0.0
    %794 = vmatprep.subr.mxu0 0.0
    %795 = vmatpush1.msra.mxu0 0.0
    %796 = vmatprep.subr.mxu0 0.0
    %797 = vmatpush1.msra.mxu0 0.0
    %798 = vmatprep.subr.mxu0 0.0
    %799 = vmatpush1.msra.mxu0 0.0
    %800 = vmatprep.mubr.f32.mxu0 0.0
    %801 = vmatmul.mubr.f32.gmra.mrb[0].mxu0 %v732
    %v802 = vpop.f32.mrb[0].mxu0
    %v803 = vadd.f32 0.0, %v802
    %v804 = vpop.f32.mrb[0].mxu0
    %v805 = vadd.f32 0.0, %v804
    %806 = vdwg.mxu0
    %807 = vmatprep.subr.mxu0 0.0
    %808 = vmatpush1.msra.mxu0 %v352
    %809 = vmatprep.subr.mxu0 0.0
    %810 = vmatpush1.msra.mxu0 %v355
    %811 = vmatprep.subr.mxu0 0.0
    %812 = vmatpush1.msra.mxu0 %v358
    %813 = vmatprep.subr.mxu0 0.0
    %814 = vmatpush1.msra.mxu0 %v361
    %815 = vmatprep.subr.mxu0 0.0
    %816 = vmatpush1.msra.mxu0 %v364
    %817 = vmatprep.subr.mxu0 0.0
    %818 = vmatpush1.msra.mxu0 %v367
    %819 = vmatprep.subr.mxu0 0.0
    %820 = vmatpush1.msra.mxu0 %v370
    %821 = vmatprep.subr.mxu0 0.0
    %822 = vmatpush1.msra.mxu0 %v373
    %823 = vmatprep.subr.mxu0 0.0
    %824 = vmatpush1.msra.mxu0 %v376
    %825 = vmatprep.subr.mxu0 0.0
    %826 = vmatpush1.msra.mxu0 %v379
    %827 = vmatprep.subr.mxu0 0.0
    %828 = vmatpush1.msra.mxu0 %v382
    %829 = vmatprep.subr.mxu0 0.0
    %830 = vmatpush1.msra.mxu0 %v385
    %831 = vmatprep.subr.mxu0 0.0
    %832 = vmatpush1.msra.mxu0 %v388
    %833 = vmatprep.subr.mxu0 0.0
    %834 = vmatpush1.msra.mxu0 %v391
    %835 = vmatprep.subr.mxu0 0.0
    %836 = vmatpush1.msra.mxu0 %v394
    %837 = vmatprep.subr.mxu0 0.0
    %838 = vmatpush1.msra.mxu0 %v397
    %839 = vmatprep.subr.mxu0 0.0
    %840 = vmatpush1.msra.mxu0 0.0
    %841 = vmatprep.subr.mxu0 0.0
    %842 = vmatpush1.msra.mxu0 0.0
    %843 = vmatprep.subr.mxu0 0.0
    %844 = vmatpush1.msra.mxu0 0.0
    %845 = vmatprep.subr.mxu0 0.0
    %846 = vmatpush1.msra.mxu0 0.0
    %847 = vmatprep.subr.mxu0 0.0
    %848 = vmatpush1.msra.mxu0 0.0
    %849 = vmatprep.subr.mxu0 0.0
    %850 = vmatpush1.msra.mxu0 0.0
    %851 = vmatprep.subr.mxu0 0.0
    %852 = vmatpush1.msra.mxu0 0.0
    %853 = vmatprep.subr.mxu0 0.0
    %854 = vmatpush1.msra.mxu0 0.0
    %855 = vmatprep.subr.mxu0 0.0
    %856 = vmatpush1.msra.mxu0 0.0
    %857 = vmatprep.subr.mxu0 0.0
    %858 = vmatpush1.msra.mxu0 0.0
    %859 = vmatprep.subr.mxu0 0.0
    %860 = vmatpush1.msra.mxu0 0.0
    %861 = vmatprep.subr.mxu0 0.0
    %862 = vmatpush1.msra.mxu0 0.0
    %863 = vmatprep.subr.mxu0 0.0
    %864 = vmatpush1.msra.mxu0 0.0
    %865 = vmatprep.subr.mxu0 0.0
    %866 = vmatpush1.msra.mxu0 0.0
    %867 = vmatprep.subr.mxu0 0.0
    %868 = vmatpush1.msra.mxu0 0.0
    %869 = vmatprep.subr.mxu0 0.0
    %870 = vmatpush1.msra.mxu0 0.0
    %871 = vmatprep.mubr.f32.mxu0 0.0
    %872 = vmatmul.mubr.f32.gmra.mrb[0].mxu0 %v732
    %v873 = vpop.f32.mrb[0].mxu0
    %v874 = vadd.f32 0.0, %v873
    %v875 = vpop.f32.mrb[0].mxu0
    %876 = vdwg.mxu0
    %v877 = vadd.f32 %v733, %v803
    %v878 = vxor.u32 %v877, 2147483648
    %v879 = vmul.f32 %v878, 1.442695
    %v880 = vpow.pop %v879
    %v881 = vadd.f32 %v880, 1.0
    %v882 = vrcp.pop %v881
    %v883 = vmul.f32 1.0, %v882
    %v884 = vadd.f32 %v734, %v805
    %v885 = vxor.u32 %v884, 2147483648
    %v886 = vmul.f32 %v885, 1.442695
    %v887 = vpow.pop %v886
    %v888 = vadd.f32 %v887, 1.0
    %v889 = vrcp.pop %v888
    %v890 = vmul.f32 1.0, %v889
    %v891 = vadd.f32 %v874, %v557
    %v892 = vmul.f32 %v883, %v891
    %v893 = vadd.f32 %v735, %v892
    %v894 = vtanh.pop %v893
    %v895 = vsub.f32 1.0, %v890
    %v896 = vmul.f32 %v895, %v894
    %v897 = vmul.f32 %v890, %v732
    %v898 = vadd.f32 %v896, %v897
    %v899 = vld [vmem:[#allocation2 + $0x48] sm:$0xff]
    %v900 = vld [vmem:[#allocation2 + $0x50] sm:$0xff]
    %v901 = vld [vmem:[#allocation2 + $0x58] sm:$0xff]
    %902 = vmatprep.subr.mxu0 %v351
    %903 = vmatpush1.msra.mxu0 %v350
    %904 = vmatprep.subr.mxu0 %v354
    %905 = vmatpush1.msra.mxu0 %v353
    %906 = vmatprep.subr.mxu0 %v357
    %907 = vmatpush1.msra.mxu0 %v356
    %908 = vmatprep.subr.mxu0 %v360
    %909 = vmatpush1.msra.mxu0 %v359
    %910 = vmatprep.subr.mxu0 %v363
    %911 = vmatpush1.msra.mxu0 %v362
    %912 = vmatprep.subr.mxu0 %v366
    %913 = vmatpush1.msra.mxu0 %v365
    %914 = vmatprep.subr.mxu0 %v369
    %915 = vmatpush1.msra.mxu0 %v368
    %916 = vmatprep.subr.mxu0 %v372
    %917 = vmatpush1.msra.mxu0 %v371
    %918 = vmatprep.subr.mxu0 %v375
    %919 = vmatpush1.msra.mxu0 %v374
    %920 = vmatprep.subr.mxu0 %v378
    %921 = vmatpush1.msra.mxu0 %v377
    %922 = vmatprep.subr.mxu0 %v381
    %923 = vmatpush1.msra.mxu0 %v380
    %924 = vmatprep.subr.mxu0 %v384
    %925 = vmatpush1.msra.mxu0 %v383
    %926 = vmatprep.subr.mxu0 %v387
    %927 = vmatpush1.msra.mxu0 %v386
    %928 = vmatprep.subr.mxu0 %v390
    %929 = vmatpush1.msra.mxu0 %v389
    %930 = vmatprep.subr.mxu0 %v393
    %931 = vmatpush1.msra.mxu0 %v392
    %932 = vmatprep.subr.mxu0 %v396
    %933 = vmatpush1.msra.mxu0 %v395
    %934 = vmatprep.subr.mxu0 0.0
    %935 = vmatpush1.msra.mxu0 0.0
    %936 = vmatprep.subr.mxu0 0.0
    %937 = vmatpush1.msra.mxu0 0.0
    %938 = vmatprep.subr.mxu0 0.0
    %939 = vmatpush1.msra.mxu0 0.0
    %940 = vmatprep.subr.mxu0 0.0
    %941 = vmatpush1.msra.mxu0 0.0
    %942 = vmatprep.subr.mxu0 0.0
    %943 = vmatpush1.msra.mxu0 0.0
    %944 = vmatprep.subr.mxu0 0.0
    %945 = vmatpush1.msra.mxu0 0.0
    %946 = vmatprep.subr.mxu0 0.0
    %947 = vmatpush1.msra.mxu0 0.0
    %948 = vmatprep.subr.mxu0 0.0
    %949 = vmatpush1.msra.mxu0 0.0
    %950 = vmatprep.subr.mxu0 0.0
    %951 = vmatpush1.msra.mxu0 0.0
    %952 = vmatprep.subr.mxu0 0.0
    %953 = vmatpush1.msra.mxu0 0.0
    %954 = vmatprep.subr.mxu0 0.0
    %955 = vmatpush1.msra.mxu0 0.0
    %956 = vmatprep.subr.mxu0 0.0
    %957 = vmatpush1.msra.mxu0 0.0
    %958 = vmatprep.subr.mxu0 0.0
    %959 = vmatpush1.msra.mxu0 0.0
    %960 = vmatprep.subr.mxu0 0.0
    %961 = vmatpush1.msra.mxu0 0.0
    %962 = vmatprep.subr.mxu0 0.0
    %963 = vmatpush1.msra.mxu0 0.0
    %964 = vmatprep.subr.mxu0 0.0
    %965 = vmatpush1.msra.mxu0 0.0
    %966 = vmatprep.mubr.f32.mxu0 0.0
    %967 = vmatmul.mubr.f32.gmra.mrb[0].mxu0 %v898
    %v968 = vpop.f32.mrb[0].mxu0
    %v969 = vadd.f32 0.0, %v968
    %v970 = vpop.f32.mrb[0].mxu0
    %v971 = vadd.f32 0.0, %v970
    %972 = vdwg.mxu0
    %973 = vmatprep.subr.mxu0 0.0
    %974 = vmatpush1.msra.mxu0 %v352
    %975 = vmatprep.subr.mxu0 0.0
    %976 = vmatpush1.msra.mxu0 %v355
    %977 = vmatprep.subr.mxu0 0.0
    %978 = vmatpush1.msra.mxu0 %v358
    %979 = vmatprep.subr.mxu0 0.0
    %980 = vmatpush1.msra.mxu0 %v361
    %981 = vmatprep.subr.mxu0 0.0
    %982 = vmatpush1.msra.mxu0 %v364
    %983 = vmatprep.subr.mxu0 0.0
    %984 = vmatpush1.msra.mxu0 %v367
    %985 = vmatprep.subr.mxu0 0.0
    %986 = vmatpush1.msra.mxu0 %v370
    %987 = vmatprep.subr.mxu0 0.0
    %988 = vmatpush1.msra.mxu0 %v373
    %989 = vmatprep.subr.mxu0 0.0
    %990 = vmatpush1.msra.mxu0 %v376
    %991 = vmatprep.subr.mxu0 0.0
    %992 = vmatpush1.msra.mxu0 %v379
    %993 = vmatprep.subr.mxu0 0.0
    %994 = vmatpush1.msra.mxu0 %v382
    %995 = vmatprep.subr.mxu0 0.0
    %996 = vmatpush1.msra.mxu0 %v385
    %997 = vmatprep.subr.mxu0 0.0
    %998 = vmatpush1.msra.mxu0 %v388
    %999 = vmatprep.subr.mxu0 0.0
    %1000 = vmatpush1.msra.mxu0 %v391
    %1001 = vmatprep.subr.mxu0 0.0
    %1002 = vmatpush1.msra.mxu0 %v394
    %1003 = vmatprep.subr.mxu0 0.0
    %1004 = vmatpush1.msra.mxu0 %v397
    %1005 = vmatprep.subr.mxu0 0.0
    %1006 = vmatpush1.msra.mxu0 0.0
    %1007 = vmatprep.subr.mxu0 0.0
    %1008 = vmatpush1.msra.mxu0 0.0
    %1009 = vmatprep.subr.mxu0 0.0
    %1010 = vmatpush1.msra.mxu0 0.0
    %1011 = vmatprep.subr.mxu0 0.0
    %1012 = vmatpush1.msra.mxu0 0.0
    %1013 = vmatprep.subr.mxu0 0.0
    %1014 = vmatpush1.msra.mxu0 0.0
    %1015 = vmatprep.subr.mxu0 0.0
    %1016 = vmatpush1.msra.mxu0 0.0
    %1017 = vmatprep.subr.mxu0 0.0
    %1018 = vmatpush1.msra.mxu0 0.0
    %1019 = vmatprep.subr.mxu0 0.0
    %1020 = vmatpush1.msra.mxu0 0.0
    %1021 = vmatprep.subr.mxu0 0.0
    %1022 = vmatpush1.msra.mxu0 0.0
    %1023 = vmatprep.subr.mxu0 0.0
    %1024 = vmatpush1.msra.mxu0 0.0
    %1025 = vmatprep.subr.mxu0 0.0
    %1026 = vmatpush1.msra.mxu0 0.0
    %1027 = vmatprep.subr.mxu0 0.0
    %1028 = vmatpush1.msra.mxu0 0.0
    %1029 = vmatprep.subr.mxu0 0.0
    %1030 = vmatpush1.msra.mxu0 0.0
    %1031 = vmatprep.subr.mxu0 0.0
    %1032 = vmatpush1.msra.mxu0 0.0
    %1033 = vmatprep.subr.mxu0 0.0
    %1034 = vmatpush1.msra.mxu0 0.0
    %1035 = vmatprep.subr.mxu0 0.0
    %1036 = vmatpush1.msra.mxu0 0.0
    %1037 = vmatprep.mubr.f32.mxu0 0.0
    %1038 = vmatmul.mubr.f32.gmra.mrb[0].mxu0 %v898
    %v1039 = vpop.f32.mrb[0].mxu0
    %v1040 = vadd.f32 0.0, %v1039
    %v1041 = vpop.f32.mrb[0].mxu0
    %1042 = vdwg.mxu0
    %v1043 = vadd.f32 %v899, %v969
    %v1044 = vxor.u32 %v1043, 2147483648
    %v1045 = vmul.f32 %v1044, 1.442695
    %v1046 = vpow.pop %v1045
    %v1047 = vadd.f32 %v1046, 1.0
    %v1048 = vrcp.pop %v1047
    %v1049 = vmul.f32 1.0, %v1048
    %v1050 = vadd.f32 %v900, %v971
    %v1051 = vxor.u32 %v1050, 2147483648
    %v1052 = vmul.f32 %v1051, 1.442695
    %v1053 = vpow.pop %v1052
    %v1054 = vadd.f32 %v1053, 1.0
    %v1055 = vrcp.pop %v1054
    %v1056 = vmul.f32 1.0, %v1055
    %v1057 = vadd.f32 %v1040, %v557
    %v1058 = vmul.f32 %v1049, %v1057
    %v1059 = vadd.f32 %v901, %v1058
    %v1060 = vtanh.pop %v1059
    %v1061 = vsub.f32 1.0, %v1056
    %v1062 = vmul.f32 %v1061, %v1060
    %v1063 = vmul.f32 %v1056, %v898
    %v1064 = vadd.f32 %v1062, %v1063
    %v1065 = vld [vmem:[#allocation2 + $0x60] sm:$0xff]
    %v1066 = vld [vmem:[#allocation2 + $0x68] sm:$0xff]
    %v1067 = vld [vmem:[#allocation2 + $0x70] sm:$0xff]
    %1068 = vmatprep.subr.mxu0 %v351
    %1069 = vmatpush1.msra.mxu0 %v350
    %1070 = vmatprep.subr.mxu0 %v354
    %1071 = vmatpush1.msra.mxu0 %v353
    %1072 = vmatprep.subr.mxu0 %v357
    %1073 = vmatpush1.msra.mxu0 %v356
    %1074 = vmatprep.subr.mxu0 %v360
    %1075 = vmatpush1.msra.mxu0 %v359
    %1076 = vmatprep.subr.mxu0 %v363
    %1077 = vmatpush1.msra.mxu0 %v362
    %1078 = vmatprep.subr.mxu0 %v366
    %1079 = vmatpush1.msra.mxu0 %v365
    %1080 = vmatprep.subr.mxu0 %v369
    %1081 = vmatpush1.msra.mxu0 %v368
    %1082 = vmatprep.subr.mxu0 %v372
    %1083 = vmatpush1.msra.mxu0 %v371
    %1084 = vmatprep.subr.mxu0 %v375
    %1085 = vmatpush1.msra.mxu0 %v374
    %1086 = vmatprep.subr.mxu0 %v378
    %1087 = vmatpush1.msra.mxu0 %v377
    %1088 = vmatprep.subr.mxu0 %v381
    %1089 = vmatpush1.msra.mxu0 %v380
    %1090 = vmatprep.subr.mxu0 %v384
    %1091 = vmatpush1.msra.mxu0 %v383
    %1092 = vmatprep.subr.mxu0 %v387
    %1093 = vmatpush1.msra.mxu0 %v386
    %1094 = vmatprep.subr.mxu0 %v390
    %1095 = vmatpush1.msra.mxu0 %v389
    %1096 = vmatprep.subr.mxu0 %v393
    %1097 = vmatpush1.msra.mxu0 %v392
    %1098 = vmatprep.subr.mxu0 %v396
    %1099 = vmatpush1.msra.mxu0 %v395
    %1100 = vmatprep.subr.mxu0 0.0
    %1101 = vmatpush1.msra.mxu0 0.0
    %1102 = vmatprep.subr.mxu0 0.0
    %1103 = vmatpush1.msra.mxu0 0.0
    %1104 = vmatprep.subr.mxu0 0.0
    %1105 = vmatpush1.msra.mxu0 0.0
    %1106 = vmatprep.subr.mxu0 0.0
    %1107 = vmatpush1.msra.mxu0 0.0
    %1108 = vmatprep.subr.mxu0 0.0
    %1109 = vmatpush1.msra.mxu0 0.0
    %1110 = vmatprep.subr.mxu0 0.0
    %1111 = vmatpush1.msra.mxu0 0.0
    %1112 = vmatprep.subr.mxu0 0.0
    %1113 = vmatpush1.msra.mxu0 0.0
    %1114 = vmatprep.subr.mxu0 0.0
    %1115 = vmatpush1.msra.mxu0 0.0
    %1116 = vmatprep.subr.mxu0 0.0
    %1117 = vmatpush1.msra.mxu0 0.0
    %1118 = vmatprep.subr.mxu0 0.0
    %1119 = vmatpush1.msra.mxu0 0.0
    %1120 = vmatprep.subr.mxu0 0.0
    %1121 = vmatpush1.msra.mxu0 0.0
    %1122 = vmatprep.subr.mxu0 0.0
    %1123 = vmatpush1.msra.mxu0 0.0
    %1124 = vmatprep.subr.mxu0 0.0
    %1125 = vmatpush1.msra.mxu0 0.0
    %1126 = vmatprep.subr.mxu0 0.0
    %1127 = vmatpush1.msra.mxu0 0.0
    %1128 = vmatprep.subr.mxu0 0.0
    %1129 = vmatpush1.msra.mxu0 0.0
    %1130 = vmatprep.subr.mxu0 0.0
    %1131 = vmatpush1.msra.mxu0 0.0
    %1132 = vmatprep.mubr.f32.mxu0 0.0
    %1133 = vmatmul.mubr.f32.gmra.mrb[0].mxu0 %v1064
    %v1134 = vpop.f32.mrb[0].mxu0
    %v1135 = vadd.f32 0.0, %v1134
    %v1136 = vpop.f32.mrb[0].mxu0
    %v1137 = vadd.f32 0.0, %v1136
    %1138 = vdwg.mxu0
    %1139 = vmatprep.subr.mxu0 0.0
    %1140 = vmatpush1.msra.mxu0 %v352
    %1141 = vmatprep.subr.mxu0 0.0
    %1142 = vmatpush1.msra.mxu0 %v355
    %1143 = vmatprep.subr.mxu0 0.0
    %1144 = vmatpush1.msra.mxu0 %v358
    %1145 = vmatprep.subr.mxu0 0.0
    %1146 = vmatpush1.msra.mxu0 %v361
    %1147 = vmatprep.subr.mxu0 0.0
    %1148 = vmatpush1.msra.mxu0 %v364
    %1149 = vmatprep.subr.mxu0 0.0
    %1150 = vmatpush1.msra.mxu0 %v367
    %1151 = vmatprep.subr.mxu0 0.0
    %1152 = vmatpush1.msra.mxu0 %v370
    %1153 = vmatprep.subr.mxu0 0.0
    %1154 = vmatpush1.msra.mxu0 %v373
    %1155 = vmatprep.subr.mxu0 0.0
    %1156 = vmatpush1.msra.mxu0 %v376
    %1157 = vmatprep.subr.mxu0 0.0
    %1158 = vmatpush1.msra.mxu0 %v379
    %1159 = vmatprep.subr.mxu0 0.0
    %1160 = vmatpush1.msra.mxu0 %v382
    %1161 = vmatprep.subr.mxu0 0.0
    %1162 = vmatpush1.msra.mxu0 %v385
    %1163 = vmatprep.subr.mxu0 0.0
    %1164 = vmatpush1.msra.mxu0 %v388
    %1165 = vmatprep.subr.mxu0 0.0
    %1166 = vmatpush1.msra.mxu0 %v391
    %1167 = vmatprep.subr.mxu0 0.0
    %1168 = vmatpush1.msra.mxu0 %v394
    %1169 = vmatprep.subr.mxu0 0.0
    %1170 = vmatpush1.msra.mxu0 %v397
    %1171 = vmatprep.subr.mxu0 0.0
    %1172 = vmatpush1.msra.mxu0 0.0
    %1173 = vmatprep.subr.mxu0 0.0
    %1174 = vmatpush1.msra.mxu0 0.0
    %1175 = vmatprep.subr.mxu0 0.0
    %1176 = vmatpush1.msra.mxu0 0.0
    %1177 = vmatprep.subr.mxu0 0.0
    %1178 = vmatpush1.msra.mxu0 0.0
    %1179 = vmatprep.subr.mxu0 0.0
    %1180 = vmatpush1.msra.mxu0 0.0
    %1181 = vmatprep.subr.mxu0 0.0
    %1182 = vmatpush1.msra.mxu0 0.0
    %1183 = vmatprep.subr.mxu0 0.0
    %1184 = vmatpush1.msra.mxu0 0.0
    %1185 = vmatprep.subr.mxu0 0.0
    %1186 = vmatpush1.msra.mxu0 0.0
    %1187 = vmatprep.subr.mxu0 0.0
    %1188 = vmatpush1.msra.mxu0 0.0
    %1189 = vmatprep.subr.mxu0 0.0
    %1190 = vmatpush1.msra.mxu0 0.0
    %1191 = vmatprep.subr.mxu0 0.0
    %1192 = vmatpush1.msra.mxu0 0.0
    %1193 = vmatprep.subr.mxu0 0.0
    %1194 = vmatpush1.msra.mxu0 0.0
    %1195 = vmatprep.subr.mxu0 0.0
    %1196 = vmatpush1.msra.mxu0 0.0
    %1197 = vmatprep.subr.mxu0 0.0
    %1198 = vmatpush1.msra.mxu0 0.0
    %1199 = vmatprep.subr.mxu0 0.0
    %1200 = vmatpush1.msra.mxu0 0.0
    %1201 = vmatprep.subr.mxu0 0.0
    %1202 = vmatpush1.msra.mxu0 0.0
    %1203 = vmatprep.mubr.f32.mxu0 0.0
    %1204 = vmatmul.mubr.f32.gmra.mrb[0].mxu0 %v1064
    %v1205 = vpop.f32.mrb[0].mxu0
    %v1206 = vadd.f32 0.0, %v1205
    %v1207 = vpop.f32.mrb[0].mxu0
    %1208 = vdwg.mxu0
    %v1209 = vadd.f32 %v1065, %v1135
    %v1210 = vxor.u32 %v1209, 2147483648
    %v1211 = vmul.f32 %v1210, 1.442695
    %v1212 = vpow.pop %v1211
    %v1213 = vadd.f32 %v1212, 1.0
    %v1214 = vrcp.pop %v1213
    %v1215 = vmul.f32 1.0, %v1214
    %v1216 = vadd.f32 %v1066, %v1137
    %v1217 = vxor.u32 %v1216, 2147483648
    %v1218 = vmul.f32 %v1217, 1.442695
    %v1219 = vpow.pop %v1218
    %v1220 = vadd.f32 %v1219, 1.0
    %v1221 = vrcp.pop %v1220
    %v1222 = vmul.f32 1.0, %v1221
    %v1223 = vadd.f32 %v1206, %v557
    %v1224 = vmul.f32 %v1215, %v1223
    %v1225 = vadd.f32 %v1067, %v1224
    %v1226 = vtanh.pop %v1225
    %v1227 = vsub.f32 1.0, %v1222
    %v1228 = vmul.f32 %v1227, %v1226
    %v1229 = vmul.f32 %v1222, %v1064
    %v1230 = vadd.f32 %v1228, %v1229
    %v1231 = vld [vmem:[#allocation2 + $0x78] sm:$0xff]
    %v1232 = vld [vmem:[#allocation2 + $0x80] sm:$0xff]
    %v1233 = vld [vmem:[#allocation2 + $0x88] sm:$0xff]
    %1234 = vmatprep.subr.mxu0 %v351
    %1235 = vmatpush1.msra.mxu0 %v350
    %1236 = vmatprep.subr.mxu0 %v354
    %1237 = vmatpush1.msra.mxu0 %v353
    %1238 = vmatprep.subr.mxu0 %v357
    %1239 = vmatpush1.msra.mxu0 %v356
    %1240 = vmatprep.subr.mxu0 %v360
    %1241 = vmatpush1.msra.mxu0 %v359
    %1242 = vmatprep.subr.mxu0 %v363
    %1243 = vmatpush1.msra.mxu0 %v362
    %1244 = vmatprep.subr.mxu0 %v366
    %1245 = vmatpush1.msra.mxu0 %v365
    %1246 = vmatprep.subr.mxu0 %v369
    %1247 = vmatpush1.msra.mxu0 %v368
    %1248 = vmatprep.subr.mxu0 %v372
    %1249 = vmatpush1.msra.mxu0 %v371
    %1250 = vmatprep.subr.mxu0 %v375
    %1251 = vmatpush1.msra.mxu0 %v374
    %1252 = vmatprep.subr.mxu0 %v378
    %1253 = vmatpush1.msra.mxu0 %v377
    %1254 = vmatprep.subr.mxu0 %v381
    %1255 = vmatpush1.msra.mxu0 %v380
    %1256 = vmatprep.subr.mxu0 %v384
    %1257 = vmatpush1.msra.mxu0 %v383
    %1258 = vmatprep.subr.mxu0 %v387
    %1259 = vmatpush1.msra.mxu0 %v386
    %1260 = vmatprep.subr.mxu0 %v390
    %1261 = vmatpush1.msra.mxu0 %v389
    %1262 = vmatprep.subr.mxu0 %v393
    %1263 = vmatpush1.msra.mxu0 %v392
    %1264 = vmatprep.subr.mxu0 %v396
    %1265 = vmatpush1.msra.mxu0 %v395
    %1266 = vmatprep.subr.mxu0 0.0
    %1267 = vmatpush1.msra.mxu0 0.0
    %1268 = vmatprep.subr.mxu0 0.0
    %1269 = vmatpush1.msra.mxu0 0.0
    %1270 = vmatprep.subr.mxu0 0.0
    %1271 = vmatpush1.msra.mxu0 0.0
    %1272 = vmatprep.subr.mxu0 0.0
    %1273 = vmatpush1.msra.mxu0 0.0
    %1274 = vmatprep.subr.mxu0 0.0
    %1275 = vmatpush1.msra.mxu0 0.0
    %1276 = vmatprep.subr.mxu0 0.0
    %1277 = vmatpush1.msra.mxu0 0.0
    %1278 = vmatprep.subr.mxu0 0.0
    %1279 = vmatpush1.msra.mxu0 0.0
    %1280 = vmatprep.subr.mxu0 0.0
    %1281 = vmatpush1.msra.mxu0 0.0
    %1282 = vmatprep.subr.mxu0 0.0
    %1283 = vmatpush1.msra.mxu0 0.0
    %1284 = vmatprep.subr.mxu0 0.0
    %1285 = vmatpush1.msra.mxu0 0.0
    %1286 = vmatprep.subr.mxu0 0.0
    %1287 = vmatpush1.msra.mxu0 0.0
    %1288 = vmatprep.subr.mxu0 0.0
    %1289 = vmatpush1.msra.mxu0 0.0
    %1290 = vmatprep.subr.mxu0 0.0
    %1291 = vmatpush1.msra.mxu0 0.0
    %1292 = vmatprep.subr.mxu0 0.0
    %1293 = vmatpush1.msra.mxu0 0.0
    %1294 = vmatprep.subr.mxu0 0.0
    %1295 = vmatpush1.msra.mxu0 0.0
    %1296 = vmatprep.subr.mxu0 0.0
    %1297 = vmatpush1.msra.mxu0 0.0
    %1298 = vmatprep.mubr.f32.mxu0 0.0
    %1299 = vmatmul.mubr.f32.gmra.mrb[0].mxu0 %v1230
    %v1300 = vpop.f32.mrb[0].mxu0
    %v1301 = vadd.f32 0.0, %v1300
    %v1302 = vpop.f32.mrb[0].mxu0
    %v1303 = vadd.f32 0.0, %v1302
    %1304 = vdwg.mxu0
    %1305 = vmatprep.subr.mxu0 0.0
    %1306 = vmatpush1.msra.mxu0 %v352
    %1307 = vmatprep.subr.mxu0 0.0
    %1308 = vmatpush1.msra.mxu0 %v355
    %1309 = vmatprep.subr.mxu0 0.0
    %1310 = vmatpush1.msra.mxu0 %v358
    %1311 = vmatprep.subr.mxu0 0.0
    %1312 = vmatpush1.msra.mxu0 %v361
    %1313 = vmatprep.subr.mxu0 0.0
    %1314 = vmatpush1.msra.mxu0 %v364
    %1315 = vmatprep.subr.mxu0 0.0
    %1316 = vmatpush1.msra.mxu0 %v367
    %1317 = vmatprep.subr.mxu0 0.0
    %1318 = vmatpush1.msra.mxu0 %v370
    %1319 = vmatprep.subr.mxu0 0.0
    %1320 = vmatpush1.msra.mxu0 %v373
    %1321 = vmatprep.subr.mxu0 0.0
    %1322 = vmatpush1.msra.mxu0 %v376
    %1323 = vmatprep.subr.mxu0 0.0
    %1324 = vmatpush1.msra.mxu0 %v379
    %1325 = vmatprep.subr.mxu0 0.0
    %1326 = vmatpush1.msra.mxu0 %v382
    %1327 = vmatprep.subr.mxu0 0.0
    %1328 = vmatpush1.msra.mxu0 %v385
    %1329 = vmatprep.subr.mxu0 0.0
    %1330 = vmatpush1.msra.mxu0 %v388
    %1331 = vmatprep.subr.mxu0 0.0
    %1332 = vmatpush1.msra.mxu0 %v391
    %1333 = vmatprep.subr.mxu0 0.0
    %1334 = vmatpush1.msra.mxu0 %v394
    %1335 = vmatprep.subr.mxu0 0.0
    %1336 = vmatpush1.msra.mxu0 %v397
    %1337 = vmatprep.subr.mxu0 0.0
    %1338 = vmatpush1.msra.mxu0 0.0
    %1339 = vmatprep.subr.mxu0 0.0
    %1340 = vmatpush1.msra.mxu0 0.0
    %1341 = vmatprep.subr.mxu0 0.0
    %1342 = vmatpush1.msra.mxu0 0.0
    %1343 = vmatprep.subr.mxu0 0.0
    %1344 = vmatpush1.msra.mxu0 0.0
    %1345 = vmatprep.subr.mxu0 0.0
    %1346 = vmatpush1.msra.mxu0 0.0
    %1347 = vmatprep.subr.mxu0 0.0
    %1348 = vmatpush1.msra.mxu0 0.0
    %1349 = vmatprep.subr.mxu0 0.0
    %1350 = vmatpush1.msra.mxu0 0.0
    %1351 = vmatprep.subr.mxu0 0.0
    %1352 = vmatpush1.msra.mxu0 0.0
    %1353 = vmatprep.subr.mxu0 0.0
    %1354 = vmatpush1.msra.mxu0 0.0
    %1355 = vmatprep.subr.mxu0 0.0
    %1356 = vmatpush1.msra.mxu0 0.0
    %1357 = vmatprep.subr.mxu0 0.0
    %1358 = vmatpush1.msra.mxu0 0.0
    %1359 = vmatprep.subr.mxu0 0.0
    %1360 = vmatpush1.msra.mxu0 0.0
    %1361 = vmatprep.subr.mxu0 0.0
    %1362 = vmatpush1.msra.mxu0 0.0
    %1363 = vmatprep.subr.mxu0 0.0
    %1364 = vmatpush1.msra.mxu0 0.0
    %1365 = vmatprep.subr.mxu0 0.0
    %1366 = vmatpush1.msra.mxu0 0.0
    %1367 = vmatprep.subr.mxu0 0.0
    %1368 = vmatpush1.msra.mxu0 0.0
    %1369 = vmatprep.mubr.f32.mxu0 0.0
    %1370 = vmatmul.mubr.f32.gmra.mrb[0].mxu0 %v1230
    %v1371 = vpop.f32.mrb[0].mxu0
    %v1372 = vadd.f32 0.0, %v1371
    %v1373 = vpop.f32.mrb[0].mxu0
    %1374 = vdwg.mxu0
    %v1375 = vadd.f32 %v1231, %v1301
    %v1376 = vxor.u32 %v1375, 2147483648
    %v1377 = vmul.f32 %v1376, 1.442695
    %v1378 = vpow.pop %v1377
    %v1379 = vadd.f32 %v1378, 1.0
    %v1380 = vrcp.pop %v1379
    %v1381 = vmul.f32 1.0, %v1380
    %v1382 = vadd.f32 %v1232, %v1303
    %v1383 = vxor.u32 %v1382, 2147483648
    %v1384 = vmul.f32 %v1383, 1.442695
    %v1385 = vpow.pop %v1384
    %v1386 = vadd.f32 %v1385, 1.0
    %v1387 = vrcp.pop %v1386
    %v1388 = vmul.f32 1.0, %v1387
    %v1389 = vadd.f32 %v1372, %v557
    %v1390 = vmul.f32 %v1381, %v1389
    %v1391 = vadd.f32 %v1233, %v1390
    %v1392 = vtanh.pop %v1391
    %v1393 = vsub.f32 1.0, %v1388
    %v1394 = vmul.f32 %v1393, %v1392
    %v1395 = vmul.f32 %v1388, %v1230
    %v1396 = vadd.f32 %v1394, %v1395
    %v1397 = vld [vmem:[#allocation2 + $0x90] sm:$0xff]
    %v1398 = vld [vmem:[#allocation2 + $0x98] sm:$0xff]
    %v1399 = vld [vmem:[#allocation2 + $0xa0] sm:$0xff]
    %1400 = vmatprep.subr.mxu0 %v351
    %1401 = vmatpush1.msra.mxu0 %v350
    %1402 = vmatprep.subr.mxu0 %v354
    %1403 = vmatpush1.msra.mxu0 %v353
    %1404 = vmatprep.subr.mxu0 %v357
    %1405 = vmatpush1.msra.mxu0 %v356
    %1406 = vmatprep.subr.mxu0 %v360
    %1407 = vmatpush1.msra.mxu0 %v359
    %1408 = vmatprep.subr.mxu0 %v363
    %1409 = vmatpush1.msra.mxu0 %v362
    %1410 = vmatprep.subr.mxu0 %v366
    %1411 = vmatpush1.msra.mxu0 %v365
    %1412 = vmatprep.subr.mxu0 %v369
    %1413 = vmatpush1.msra.mxu0 %v368
    %1414 = vmatprep.subr.mxu0 %v372
    %1415 = vmatpush1.msra.mxu0 %v371
    %1416 = vmatprep.subr.mxu0 %v375
    %1417 = vmatpush1.msra.mxu0 %v374
    %1418 = vmatprep.subr.mxu0 %v378
    %1419 = vmatpush1.msra.mxu0 %v377
    %1420 = vmatprep.subr.mxu0 %v381
    %1421 = vmatpush1.msra.mxu0 %v380
    %1422 = vmatprep.subr.mxu0 %v384
    %1423 = vmatpush1.msra.mxu0 %v383
    %1424 = vmatprep.subr.mxu0 %v387
    %1425 = vmatpush1.msra.mxu0 %v386
    %1426 = vmatprep.subr.mxu0 %v390
    %1427 = vmatpush1.msra.mxu0 %v389
    %1428 = vmatprep.subr.mxu0 %v393
    %1429 = vmatpush1.msra.mxu0 %v392
    %1430 = vmatprep.subr.mxu0 %v396
    %1431 = vmatpush1.msra.mxu0 %v395
    %1432 = vmatprep.subr.mxu0 0.0
    %1433 = vmatpush1.msra.mxu0 0.0
    %1434 = vmatprep.subr.mxu0 0.0
    %1435 = vmatpush1.msra.mxu0 0.0
    %1436 = vmatprep.subr.mxu0 0.0
    %1437 = vmatpush1.msra.mxu0 0.0
    %1438 = vmatprep.subr.mxu0 0.0
    %1439 = vmatpush1.msra.mxu0 0.0
    %1440 = vmatprep.subr.mxu0 0.0
    %1441 = vmatpush1.msra.mxu0 0.0
    %1442 = vmatprep.subr.mxu0 0.0
    %1443 = vmatpush1.msra.mxu0 0.0
    %1444 = vmatprep.subr.mxu0 0.0
    %1445 = vmatpush1.msra.mxu0 0.0
    %1446 = vmatprep.subr.mxu0 0.0
    %1447 = vmatpush1.msra.mxu0 0.0
    %1448 = vmatprep.subr.mxu0 0.0
    %1449 = vmatpush1.msra.mxu0 0.0
    %1450 = vmatprep.subr.mxu0 0.0
    %1451 = vmatpush1.msra.mxu0 0.0
    %1452 = vmatprep.subr.mxu0 0.0
    %1453 = vmatpush1.msra.mxu0 0.0
    %1454 = vmatprep.subr.mxu0 0.0
    %1455 = vmatpush1.msra.mxu0 0.0
    %1456 = vmatprep.subr.mxu0 0.0
    %1457 = vmatpush1.msra.mxu0 0.0
    %1458 = vmatprep.subr.mxu0 0.0
    %1459 = vmatpush1.msra.mxu0 0.0
    %1460 = vmatprep.subr.mxu0 0.0
    %1461 = vmatpush1.msra.mxu0 0.0
    %1462 = vmatprep.subr.mxu0 0.0
    %1463 = vmatpush1.msra.mxu0 0.0
    %1464 = vmatprep.mubr.f32.mxu0 0.0
    %1465 = vmatmul.mubr.f32.gmra.mrb[0].mxu0 %v1396
    %v1466 = vpop.f32.mrb[0].mxu0
    %v1467 = vadd.f32 0.0, %v1466
    %v1468 = vpop.f32.mrb[0].mxu0
    %v1469 = vadd.f32 0.0, %v1468
    %1470 = vdwg.mxu0
    %1471 = vmatprep.subr.mxu0 0.0
    %1472 = vmatpush1.msra.mxu0 %v352
    %1473 = vmatprep.subr.mxu0 0.0
    %1474 = vmatpush1.msra.mxu0 %v355
    %1475 = vmatprep.subr.mxu0 0.0
    %1476 = vmatpush1.msra.mxu0 %v358
    %1477 = vmatprep.subr.mxu0 0.0
    %1478 = vmatpush1.msra.mxu0 %v361
    %1479 = vmatprep.subr.mxu0 0.0
    %1480 = vmatpush1.msra.mxu0 %v364
    %1481 = vmatprep.subr.mxu0 0.0
    %1482 = vmatpush1.msra.mxu0 %v367
    %1483 = vmatprep.subr.mxu0 0.0
    %1484 = vmatpush1.msra.mxu0 %v370
    %1485 = vmatprep.subr.mxu0 0.0
    %1486 = vmatpush1.msra.mxu0 %v373
    %1487 = vmatprep.subr.mxu0 0.0
    %1488 = vmatpush1.msra.mxu0 %v376
    %1489 = vmatprep.subr.mxu0 0.0
    %1490 = vmatpush1.msra.mxu0 %v379
    %1491 = vmatprep.subr.mxu0 0.0
    %1492 = vmatpush1.msra.mxu0 %v382
    %1493 = vmatprep.subr.mxu0 0.0
    %1494 = vmatpush1.msra.mxu0 %v385
    %1495 = vmatprep.subr.mxu0 0.0
    %1496 = vmatpush1.msra.mxu0 %v388
    %1497 = vmatprep.subr.mxu0 0.0
    %1498 = vmatpush1.msra.mxu0 %v391
    %1499 = vmatprep.subr.mxu0 0.0
    %1500 = vmatpush1.msra.mxu0 %v394
    %1501 = vmatprep.subr.mxu0 0.0
    %1502 = vmatpush1.msra.mxu0 %v397
    %1503 = vmatprep.subr.mxu0 0.0
    %1504 = vmatpush1.msra.mxu0 0.0
    %1505 = vmatprep.subr.mxu0 0.0
    %1506 = vmatpush1.msra.mxu0 0.0
    %1507 = vmatprep.subr.mxu0 0.0
    %1508 = vmatpush1.msra.mxu0 0.0
    %1509 = vmatprep.subr.mxu0 0.0
    %1510 = vmatpush1.msra.mxu0 0.0
    %1511 = vmatprep.subr.mxu0 0.0
    %1512 = vmatpush1.msra.mxu0 0.0
    %1513 = vmatprep.subr.mxu0 0.0
    %1514 = vmatpush1.msra.mxu0 0.0
    %1515 = vmatprep.subr.mxu0 0.0
    %1516 = vmatpush1.msra.mxu0 0.0
    %1517 = vmatprep.subr.mxu0 0.0
    %1518 = vmatpush1.msra.mxu0 0.0
    %1519 = vmatprep.subr.mxu0 0.0
    %1520 = vmatpush1.msra.mxu0 0.0
    %1521 = vmatprep.subr.mxu0 0.0
    %1522 = vmatpush1.msra.mxu0 0.0
    %1523 = vmatprep.subr.mxu0 0.0
    %1524 = vmatpush1.msra.mxu0 0.0
    %1525 = vmatprep.subr.mxu0 0.0
    %1526 = vmatpush1.msra.mxu0 0.0
    %1527 = vmatprep.subr.mxu0 0.0
    %1528 = vmatpush1.msra.mxu0 0.0
    %1529 = vmatprep.subr.mxu0 0.0
    %1530 = vmatpush1.msra.mxu0 0.0
    %1531 = vmatprep.subr.mxu0 0.0
    %1532 = vmatpush1.msra.mxu0 0.0
    %1533 = vmatprep.subr.mxu0 0.0
    %1534 = vmatpush1.msra.mxu0 0.0
    %1535 = vmatprep.mubr.f32.mxu0 0.0
    %1536 = vmatmul.mubr.f32.gmra.mrb[0].mxu0 %v1396
    %v1537 = vpop.f32.mrb[0].mxu0
    %v1538 = vadd.f32 0.0, %v1537
    %v1539 = vpop.f32.mrb[0].mxu0
    %1540 = vdwg.mxu0
    %v1541 = vadd.f32 %v1397, %v1467
    %v1542 = vxor.u32 %v1541, 2147483648
    %v1543 = vmul.f32 %v1542, 1.442695
    %v1544 = vpow.pop %v1543
    %v1545 = vadd.f32 %v1544, 1.0
    %v1546 = vrcp.pop %v1545
    %v1547 = vmul.f32 1.0, %v1546
    %v1548 = vadd.f32 %v1398, %v1469
    %v1549 = vxor.u32 %v1548, 2147483648
    %v1550 = vmul.f32 %v1549, 1.442695
    %v1551 = vpow.pop %v1550
    %v1552 = vadd.f32 %v1551, 1.0
    %v1553 = vrcp.pop %v1552
    %v1554 = vmul.f32 1.0, %v1553
    %v1555 = vadd.f32 %v1538, %v557
    %v1556 = vmul.f32 %v1547, %v1555
    %v1557 = vadd.f32 %v1399, %v1556
    %v1558 = vtanh.pop %v1557
    %v1559 = vsub.f32 1.0, %v1554
    %v1560 = vmul.f32 %v1559, %v1558
    %v1561 = vmul.f32 %v1554, %v1396
    %v1562 = vadd.f32 %v1560, %v1561
    %v1563 = vld [vmem:[#allocation2 + $0xa8] sm:$0xff]
    %v1564 = vld [vmem:[#allocation2 + $0xb0] sm:$0xff]
    %v1565 = vld [vmem:[#allocation2 + $0xb8] sm:$0xff]
    %1566 = vmatprep.subr.mxu0 %v351
    %1567 = vmatpush1.msra.mxu0 %v350
    %1568 = vmatprep.subr.mxu0 %v354
    %1569 = vmatpush1.msra.mxu0 %v353
    %1570 = vmatprep.subr.mxu0 %v357
    %1571 = vmatpush1.msra.mxu0 %v356
    %1572 = vmatprep.subr.mxu0 %v360
    %1573 = vmatpush1.msra.mxu0 %v359
    %1574 = vmatprep.subr.mxu0 %v363
    %1575 = vmatpush1.msra.mxu0 %v362
    %1576 = vmatprep.subr.mxu0 %v366
    %1577 = vmatpush1.msra.mxu0 %v365
    %1578 = vmatprep.subr.mxu0 %v369
    %1579 = vmatpush1.msra.mxu0 %v368
    %1580 = vmatprep.subr.mxu0 %v372
    %1581 = vmatpush1.msra.mxu0 %v371
    %1582 = vmatprep.subr.mxu0 %v375
    %1583 = vmatpush1.msra.mxu0 %v374
    %1584 = vmatprep.subr.mxu0 %v378
    %1585 = vmatpush1.msra.mxu0 %v377
    %1586 = vmatprep.subr.mxu0 %v381
    %1587 = vmatpush1.msra.mxu0 %v380
    %1588 = vmatprep.subr.mxu0 %v384
    %1589 = vmatpush1.msra.mxu0 %v383
    %1590 = vmatprep.subr.mxu0 %v387
    %1591 = vmatpush1.msra.mxu0 %v386
    %1592 = vmatprep.subr.mxu0 %v390
    %1593 = vmatpush1.msra.mxu0 %v389
    %1594 = vmatprep.subr.mxu0 %v393
    %1595 = vmatpush1.msra.mxu0 %v392
    %1596 = vmatprep.subr.mxu0 %v396
    %1597 = vmatpush1.msra.mxu0 %v395
    %1598 = vmatprep.subr.mxu0 0.0
    %1599 = vmatpush1.msra.mxu0 0.0
    %1600 = vmatprep.subr.mxu0 0.0
    %1601 = vmatpush1.msra.mxu0 0.0
    %1602 = vmatprep.subr.mxu0 0.0
    %1603 = vmatpush1.msra.mxu0 0.0
    %1604 = vmatprep.subr.mxu0 0.0
    %1605 = vmatpush1.msra.mxu0 0.0
    %1606 = vmatprep.subr.mxu0 0.0
    %1607 = vmatpush1.msra.mxu0 0.0
    %1608 = vmatprep.subr.mxu0 0.0
    %1609 = vmatpush1.msra.mxu0 0.0
    %1610 = vmatprep.subr.mxu0 0.0
    %1611 = vmatpush1.msra.mxu0 0.0
    %1612 = vmatprep.subr.mxu0 0.0
    %1613 = vmatpush1.msra.mxu0 0.0
    %1614 = vmatprep.subr.mxu0 0.0
    %1615 = vmatpush1.msra.mxu0 0.0
    %1616 = vmatprep.subr.mxu0 0.0
    %1617 = vmatpush1.msra.mxu0 0.0
    %1618 = vmatprep.subr.mxu0 0.0
    %1619 = vmatpush1.msra.mxu0 0.0
    %1620 = vmatprep.subr.mxu0 0.0
    %1621 = vmatpush1.msra.mxu0 0.0
    %1622 = vmatprep.subr.mxu0 0.0
    %1623 = vmatpush1.msra.mxu0 0.0
    %1624 = vmatprep.subr.mxu0 0.0
    %1625 = vmatpush1.msra.mxu0 0.0
    %1626 = vmatprep.subr.mxu0 0.0
    %1627 = vmatpush1.msra.mxu0 0.0
    %1628 = vmatprep.subr.mxu0 0.0
    %1629 = vmatpush1.msra.mxu0 0.0
    %1630 = vmatprep.mubr.f32.mxu0 0.0
    %1631 = vmatmul.mubr.f32.gmra.mrb[0].mxu0 %v1562
    %v1632 = vpop.f32.mrb[0].mxu0
    %v1633 = vadd.f32 0.0, %v1632
    %v1634 = vpop.f32.mrb[0].mxu0
    %v1635 = vadd.f32 0.0, %v1634
    %1636 = vdwg.mxu0
    %1637 = vmatprep.subr.mxu0 0.0
    %1638 = vmatpush1.msra.mxu0 %v352
    %1639 = vmatprep.subr.mxu0 0.0
    %1640 = vmatpush1.msra.mxu0 %v355
    %1641 = vmatprep.subr.mxu0 0.0
    %1642 = vmatpush1.msra.mxu0 %v358
    %1643 = vmatprep.subr.mxu0 0.0
    %1644 = vmatpush1.msra.mxu0 %v361
    %1645 = vmatprep.subr.mxu0 0.0
    %1646 = vmatpush1.msra.mxu0 %v364
    %1647 = vmatprep.subr.mxu0 0.0
    %1648 = vmatpush1.msra.mxu0 %v367
    %1649 = vmatprep.subr.mxu0 0.0
    %1650 = vmatpush1.msra.mxu0 %v370
    %1651 = vmatprep.subr.mxu0 0.0
    %1652 = vmatpush1.msra.mxu0 %v373
    %1653 = vmatprep.subr.mxu0 0.0
    %1654 = vmatpush1.msra.mxu0 %v376
    %1655 = vmatprep.subr.mxu0 0.0
    %1656 = vmatpush1.msra.mxu0 %v379
    %1657 = vmatprep.subr.mxu0 0.0
    %1658 = vmatpush1.msra.mxu0 %v382
    %1659 = vmatprep.subr.mxu0 0.0
    %1660 = vmatpush1.msra.mxu0 %v385
    %1661 = vmatprep.subr.mxu0 0.0
    %1662 = vmatpush1.msra.mxu0 %v388
    %1663 = vmatprep.subr.mxu0 0.0
    %1664 = vmatpush1.msra.mxu0 %v391
    %1665 = vmatprep.subr.mxu0 0.0
    %1666 = vmatpush1.msra.mxu0 %v394
    %1667 = vmatprep.subr.mxu0 0.0
    %1668 = vmatpush1.msra.mxu0 %v397
    %1669 = vmatprep.subr.mxu0 0.0
    %1670 = vmatpush1.msra.mxu0 0.0
    %1671 = vmatprep.subr.mxu0 0.0
    %1672 = vmatpush1.msra.mxu0 0.0
    %1673 = vmatprep.subr.mxu0 0.0
    %1674 = vmatpush1.msra.mxu0 0.0
    %1675 = vmatprep.subr.mxu0 0.0
    %1676 = vmatpush1.msra.mxu0 0.0
    %1677 = vmatprep.subr.mxu0 0.0
    %1678 = vmatpush1.msra.mxu0 0.0
    %1679 = vmatprep.subr.mxu0 0.0
    %1680 = vmatpush1.msra.mxu0 0.0
    %1681 = vmatprep.subr.mxu0 0.0
    %1682 = vmatpush1.msra.mxu0 0.0
    %1683 = vmatprep.subr.mxu0 0.0
    %1684 = vmatpush1.msra.mxu0 0.0
    %1685 = vmatprep.subr.mxu0 0.0
    %1686 = vmatpush1.msra.mxu0 0.0
    %1687 = vmatprep.subr.mxu0 0.0
    %1688 = vmatpush1.msra.mxu0 0.0
    %1689 = vmatprep.subr.mxu0 0.0
    %1690 = vmatpush1.msra.mxu0 0.0
    %1691 = vmatprep.subr.mxu0 0.0
    %1692 = vmatpush1.msra.mxu0 0.0
    %1693 = vmatprep.subr.mxu0 0.0
    %1694 = vmatpush1.msra.mxu0 0.0
    %1695 = vmatprep.subr.mxu0 0.0
    %1696 = vmatpush1.msra.mxu0 0.0
    %1697 = vmatprep.subr.mxu0 0.0
    %1698 = vmatpush1.msra.mxu0 0.0
    %1699 = vmatprep.subr.mxu0 0.0
    %1700 = vmatpush1.msra.mxu0 0.0
    %1701 = vmatprep.mubr.f32.mxu0 0.0
    %1702 = vmatmul.mubr.f32.gmra.mrb[0].mxu0 %v1562
    %v1703 = vpop.f32.mrb[0].mxu0
    %v1704 = vadd.f32 0.0, %v1703
    %v1705 = vpop.f32.mrb[0].mxu0
    %1706 = vdwg.mxu0
    %v1707 = vadd.f32 %v1563, %v1633
    %v1708 = vxor.u32 %v1707, 2147483648
    %v1709 = vmul.f32 %v1708, 1.442695
    %v1710 = vpow.pop %v1709
    %v1711 = vadd.f32 %v1710, 1.0
    %v1712 = vrcp.pop %v1711
    %v1713 = vmul.f32 1.0, %v1712
    %v1714 = vadd.f32 %v1564, %v1635
    %v1715 = vxor.u32 %v1714, 2147483648
    %v1716 = vmul.f32 %v1715, 1.442695
    %v1717 = vpow.pop %v1716
    %v1718 = vadd.f32 %v1717, 1.0
    %v1719 = vrcp.pop %v1718
    %v1720 = vmul.f32 1.0, %v1719
    %v1721 = vadd.f32 %v1704, %v557
    %v1722 = vmul.f32 %v1713, %v1721
    %v1723 = vadd.f32 %v1565, %v1722
    %v1724 = vtanh.pop %v1723
    %v1725 = vsub.f32 1.0, %v1720
    %v1726 = vmul.f32 %v1725, %v1724
    %v1727 = vmul.f32 %v1720, %v1562
    %v1728 = vadd.f32 %v1726, %v1727
    %v1729 = vld [vmem:[%s5] sm:$0x1]
    %v1731 = vlaneseq
    %v1732 = vshrl.u32 %v1731, 7
    %v1733 = vsub.s32 0, %v1732
    %v1734 = vrot.slane %v1729, %v1733
    %v1736 = vmul.f32 %v1728, %v1734
    %1737 = vadd.xlane.f32.xlu0 %v1736
    %v1738 = vpop.xlane.xlu0 %1737
    %v1739 = vld [vmem:[#allocation3] sm:$0x1]
    %v1741 = vlaneseq
    %v1742 = vshrl.u32 %v1741, 7
    %v1743 = vsub.s32 0, %v1742
    %v1744 = vrot.slane %v1739, %v1743
    %v1746 = vadd.f32 %v1738, %v1744
    %v1747 = vmul.f32 %v1746, 1.442695
    %v1748 = vpow.pop %v1747
    %vm1749 = vcmask 3072
    %1750 = vst.msk [vmem:[%s7] sm:$0xf] %vm1749, %v1748
    // Predicated region
    $region34: #{tpu_custom_call.1} parent=1 // pred_check
      _
    $region35: #{tpu_custom_call.1} parent=1 // pred_check_branch
      %1752 = sbr.rel (0) target = $region37
    $region36: #{tpu_custom_call.1} parent=1 // pred_region
      _
    $region37: #{tpu_custom_call.1} parent=1 // pred_fallthru
      _
    // Predicated region
    $region38: #{tpu_custom_call.1} parent=1 // pred_check
      _
    $region39: #{tpu_custom_call.1} parent=1 // pred_check_branch
      %1754 = sbr.rel (0) target = $region41
    $region40: #{tpu_custom_call.1} parent=1 // pred_region
      _
    $region41: #{tpu_custom_call.1} parent=1 // pred_fallthru
      _
    %1755 = vsyncpa [#allocation5], 1

</llo_original>
